<compile_context>
chip_gen: v6e
topology: v6e:2x2x1
jax: 0.10.0
libtpu: 0.0.40
codegen_flags: <defaults>
</compile_context>

<pallas_src>
import math

import jax
import jax.numpy as jnp
from jax import lax
from jax.experimental import pallas as pl
from jax.experimental.pallas import tpu as pltpu


def _transformer_layer_kernel(
    x_ref,                      # (block_n, L, C) f32   activations (batch-major)
    wq_ref, wk_ref, wv_ref,     # (1, C, d)  bf16       folded per-head q/k/v projections
    bq_ref, bk_ref, bv_ref,     # (1, 1, d)  f32        per-head in-proj biases (q pre-scaled)
    wo_ref,                     # (1, d, C)  bf16       per-head slice of out-proj weight
    bo_ref,                     # (1, C)     f32        out-proj bias
    w12_ref,                    # (C, C)     bf16       folded fc2(fc1(.)) weight
    o_ref,                      # (block_n, L, C) f32
    acc_ref,                    # (block_n*L, C) f32    VMEM scratch: sum_h ctx_h @ Wo_h
):
    h = pl.program_id(1)
    nb, L, C = x_ref.shape
    T = nb * L

    @pl.when(h == 0)
    def _init():
        acc_ref[...] = jnp.zeros_like(acc_ref)

    x = x_ref[...].reshape(T, C)              # f32, kept for residuals
    xb = x.astype(jnp.bfloat16)               # bf16 only at MXU inputs

    # Folded per-head projections: x @ (wq^T wiq^T)[:, h*d:(h+1)*d] + biq ; 1/sqrt(d) scale
    # is folded into wq/bq at param-prep time, so no per-head VPU multiply here.
    q = jnp.dot(xb, wq_ref[0], preferred_element_type=jnp.float32) + bq_ref[0]   # (T, d)
    k = jnp.dot(xb, wk_ref[0], preferred_element_type=jnp.float32) + bk_ref[0]
    v = jnp.dot(xb, wv_ref[0], preferred_element_type=jnp.float32) + bv_ref[0]

    d = q.shape[-1]
    qh = q.reshape(nb, L, d).astype(jnp.bfloat16)
    kh = k.reshape(nb, L, d).astype(jnp.bfloat16)
    vh = v.reshape(nb, L, d).astype(jnp.bfloat16)

    # Scaled-dot-product attention for this head, batched over the batch block.
    # Softmax math stays f32 (v5e has no bf16 VPU); divide goes to the EUP.
    s = jnp.einsum("bqd,bkd->bqk", qh, kh, preferred_element_type=jnp.float32)   # (nb, L, L)
    s = s - jnp.max(s, axis=-1, keepdims=True)
    p = jnp.exp(s)
    p = p * pl.reciprocal(jnp.sum(p, axis=-1, keepdims=True), approx=True)

    ctx = jnp.einsum("bqk,bkd->bqd", p.astype(jnp.bfloat16), vh,
                     preferred_element_type=jnp.float32)                          # (nb, L, d)

    # Fused out-projection: concat_h(ctx_h) @ Wo == sum_h ctx_h @ Wo[h*d:(h+1)*d, :].
    acc_ref[...] += jnp.dot(ctx.reshape(T, d).astype(jnp.bfloat16), wo_ref[0],
                            preferred_element_type=jnp.float32)                   # (T, C)

    @pl.when(h == pl.num_programs(1) - 1)
    def _finalize():
        x1 = acc_ref[...] + bo_ref[...] + x                         # attention + bias + residual
        # Folded MLP (the spec module has NO nonlinearity between fc1 and fc2, so the
        # offline product W12 = fc1^T @ fc2^T is exact) + second residual.
        y = jnp.dot(x1.astype(jnp.bfloat16), w12_ref[...],
                    preferred_element_type=jnp.float32) + x1
        o_ref[...] = y.reshape(nb, L, C).astype(o_ref.dtype)


def prepare_params(params, num_heads, compute_dtype=jnp.bfloat16):
    """One-time parameter preparation (hoisted out of the per-call path).

    Folds q/k/v linears into the MHA in-projection, folds the 1/sqrt(d) scale into the
    q weights/bias, folds fc1 @ fc2, lays heads out on a leading axis so the kernel's
    per-head slicing happens in BlockSpec index_maps (DMA level), and casts MXU weights
    to bf16 (biases stay f32).
    """
    C = params["wq"].shape[0]
    H = num_heads
    assert C % H == 0, "embed dim must be divisible by num_heads"
    d = C // H
    scale = 1.0 / math.sqrt(d)

    wiq, wik, wiv = jnp.split(params["in_proj_w"], 3, axis=0)
    biq, bik, biv = jnp.split(params["in_proj_b"], 3, axis=0)

    def fold(w_pre, w_in, b_in, s):
        # y = ((x @ w_pre^T) @ w_in^T + b_in) * s  ==  x @ (w_pre^T @ w_in^T * s) + b_in * s
        w = (w_pre.T @ w_in.T) * s                       # (C, C), folded in f32
        w_h = w.reshape(C, H, d).transpose(1, 0, 2)      # (H, C, d): heads on leading axis
        b_h = (b_in * s).reshape(H, 1, d)
        return w_h.astype(compute_dtype), b_h.astype(jnp.float32)

    wq_h, bq_h = fold(params["wq"], wiq, biq, scale)     # scale folded into q path only
    wk_h, bk_h = fold(params["wk"], wik, bik, 1.0)
    wv_h, bv_h = fold(params["wv"], wiv, biv, 1.0)

    wo_h = params["out_w"].T.reshape(H, d, C).astype(compute_dtype)   # per-head out-proj rows
    bo = params["out_b"].reshape(1, C).astype(jnp.float32)
    w12 = (params["fc1"].T @ params["fc2"].T).astype(compute_dtype)   # exact fold (linear MLP)

    return dict(wq=wq_h, wk=wk_h, wv=wv_h, bq=bq_h, bk=bk_h, bv=bv_h,
                wo=wo_h, bo=bo, w12=w12)


def transformer_layer(x, prep, *, block_n=None):
    """Fused TransformerLayer forward.

    x: (N, L, C) batch-major activations (keep activations batch-major end-to-end to avoid
       HBM layout transposes around the kernel; per-example math is identical to the
       PyTorch (L, N, C) module).
    prep: output of prepare_params().
    """
    N, L, C = x.shape
    H, _, d = prep["wq"].shape

    if block_n is None:
        # Block several batch elements per grid step, but keep >=2 steps along the
        # parallel axis so both TensorCores are fed on v7x.
        block_n = N // 2 if (N >= 2 and N % 2 == 0) else N
    assert N % block_n == 0, "batch must be divisible by block_n"
    n_blocks = N // block_n

    x_spec = pl.BlockSpec((block_n, L, C), lambda b, h: (b, 0, 0))
    out_spec = pl.BlockSpec((block_n, L, C), lambda b, h: (b, 0, 0))
    w_head_spec = pl.BlockSpec((1, C, d), lambda b, h: (h, 0, 0))
    b_head_spec = pl.BlockSpec((1, 1, d), lambda b, h: (h, 0, 0))
    wo_spec = pl.BlockSpec((1, d, C), lambda b, h: (h, 0, 0))
    bo_spec = pl.BlockSpec((1, C), lambda b, h: (0, 0))
    w12_spec = pl.BlockSpec((C, C), lambda b, h: (0, 0))

    return pl.pallas_call(
        _transformer_layer_kernel,
        out_shape=jax.ShapeDtypeStruct((N, L, C), x.dtype),
        grid_spec=pltpu.PrefetchScalarGridSpec(
            num_scalar_prefetch=0,
            grid=(n_blocks, H),                     # heads innermost (reduction axis last)
            in_specs=[x_spec,
                      w_head_spec, w_head_spec, w_head_spec,
                      b_head_spec, b_head_spec, b_head_spec,
                      wo_spec, bo_spec, w12_spec],
            out_specs=out_spec,
            scratch_shapes=[pltpu.VMEM((block_n * L, C), jnp.float32)],
        ),
        compiler_params=pltpu.CompilerParams(
            dimension_semantics=("parallel", "arbitrary"),
            vmem_limit_bytes=32 * 1024 * 1024,
        ),
    )(x, prep["wq"], prep["wk"], prep["wv"],
      prep["bq"], prep["bk"], prep["bv"],
      prep["wo"], prep["bo"], prep["w12"])


def init_params(key, c):
    """Parameters in PyTorch layout: weights are (out, in)."""
    ks = jax.random.split(key, 9)
    s = 1.0 / math.sqrt(c)
    return {
        "wq": jax.random.normal(ks[0], (c, c), jnp.float32) * s,
        "wk": jax.random.normal(ks[1], (c, c), jnp.float32) * s,
        "wv": jax.random.normal(ks[2], (c, c), jnp.float32) * s,
        "in_proj_w": jax.random.normal(ks[3], (3 * c, c), jnp.float32) * s,
        "in_proj_b": jax.random.normal(ks[4], (3 * c,), jnp.float32) * 0.02,
        "out_w": jax.random.normal(ks[5], (c, c), jnp.float32) * s,
        "out_b": jax.random.normal(ks[6], (c,), jnp.float32) * 0.02,
        "fc1": jax.random.normal(ks[7], (c, c), jnp.float32) * s,
        "fc2": jax.random.normal(ks[8], (c, c), jnp.float32) * s,
    }


def transformer_layer_ref(x, p, num_heads):
    """Pure-JAX f32 reference on batch-major (N, L, C), torch weight layout (out, in)."""
    N, L, C = x.shape
    d = C // num_heads
    hi = lax.Precision.HIGHEST

    def lin(t, w, b=None):
        y = jnp.einsum("nlc,oc->nlo", t, w, precision=hi)
        return y if b is None else y + b

    q = lin(x, p["wq"]); k = lin(x, p["wk"]); v = lin(x, p["wv"])
    wiq, wik, wiv = jnp.split(p["in_proj_w"], 3, axis=0)
    biq, bik, biv = jnp.split(p["in_proj_b"], 3, axis=0)
    q = lin(q, wiq, biq); k = lin(k, wik, bik); v = lin(v, wiv, biv)

    qh = q.reshape(N, L, num_heads, d)
    kh = k.reshape(N, L, num_heads, d)
    vh = v.reshape(N, L, num_heads, d)
    s = jnp.einsum("nlhd,nmhd->nhlm", qh, kh, precision=hi) / math.sqrt(d)
    a = jax.nn.softmax(s, axis=-1)
    o = jnp.einsum("nhlm,nmhd->nlhd", a, vh, precision=hi).reshape(N, L, C)
    attn = lin(o, p["out_w"], p["out_b"])
    x1 = attn + x
    return lin(lin(x1, p["fc1"]), p["fc2"]) + x1


if __name__ == "__main__":
    # Small but lane-dense shapes: batch=4, seq=16, embed=128, heads=4 (head dim 32).
    N, L, C, H = 4, 16, 128, 4
    key = jax.random.PRNGKey(0)
    kx, kp = jax.random.split(key)
    x = jax.random.normal(kx, (N, L, C), jnp.float32)
    params = init_params(kp, C)

    prep = prepare_params(params, H)          # one-time weight folding / layout prep
    y = transformer_layer(x, prep)
    y = jax.block_until_ready(y)

    y_ref = transformer_layer_ref(x, params, H)
    assert y.shape == x.shape and y.dtype == x.dtype

    # bf16 MXU inputs (f32 accumulation) + approx reciprocal -> compare with a relative
    # tolerance scaled to the output magnitude instead of the previous 5e-3 absolute.
    abs_err = float(jnp.max(jnp.abs(y - y_ref)))
    ref_scale = float(jnp.max(jnp.abs(y_ref)))
    rel_err = abs_err / max(ref_scale, 1.0)
    assert rel_err < 4e-2, f"relative err {rel_err} (abs {abs_err}, scale {ref_scale})"
    print("KERNEL_OK")
</pallas_src>

<mosaic_0001>
module attributes {stable_mosaic.version = 11 : i64} {
  func.func @_transformer_layer_kernel(%arg0: i32, %arg1: i32, %arg2: memref<2x16x128xf32, #tpu.memory_space<vmem>>, %arg3: memref<1x128x32xbf16, #tpu.memory_space<vmem>>, %arg4: memref<1x128x32xbf16, #tpu.memory_space<vmem>>, %arg5: memref<1x128x32xbf16, #tpu.memory_space<vmem>>, %arg6: memref<1x1x32xf32, #tpu.memory_space<vmem>>, %arg7: memref<1x1x32xf32, #tpu.memory_space<vmem>>, %arg8: memref<1x1x32xf32, #tpu.memory_space<vmem>>, %arg9: memref<1x32x128xbf16, #tpu.memory_space<vmem>>, %arg10: memref<1x128xf32, #tpu.memory_space<vmem>>, %arg11: memref<128x128xbf16, #tpu.memory_space<vmem>>, %arg12: memref<2x16x128xf32, #tpu.memory_space<vmem>>, %arg13: memref<32x128xf32, #tpu.memory_space<vmem>>) attributes {dimension_semantics = [#tpu.dimension_semantics<parallel>, #tpu.dimension_semantics<arbitrary>], iteration_bounds = array<i64: 2, 4>, scalar_prefetch = 0 : i64, scratch_operands = 1 : i64, tpu.core_type = #tpu.core_type<tc>, window_params = [{transform_indices = @transform_0, window_bounds = array<i64: 2, 16, 128>}, {transform_indices = @transform_1, window_bounds = array<i64: 1, 128, 32>}, {transform_indices = @transform_2, window_bounds = array<i64: 1, 128, 32>}, {transform_indices = @transform_3, window_bounds = array<i64: 1, 128, 32>}, {transform_indices = @transform_4, window_bounds = array<i64: 1, 1, 32>}, {transform_indices = @transform_5, window_bounds = array<i64: 1, 1, 32>}, {transform_indices = @transform_6, window_bounds = array<i64: 1, 1, 32>}, {transform_indices = @transform_7, window_bounds = array<i64: 1, 32, 128>}, {pipeline_mode = #tpu.pipeline_mode<synchronous>, transform_indices = @transform_8, window_bounds = array<i64: 1, 128>}, {pipeline_mode = #tpu.pipeline_mode<synchronous>, transform_indices = @transform_9, window_bounds = array<i64: 128, 128>}, {transform_indices = @transform_10, window_bounds = array<i64: 2, 16, 128>}]} {
    %c0_i32 = arith.constant 0 : i32
    %0 = arith.cmpi eq, %arg1, %c0_i32 : i32
    %1 = arith.extui %0 : i1 to i32
    %c0_i32_0 = arith.constant 0 : i32
    %2 = arith.cmpi ne, %1, %c0_i32_0 : i32
    scf.if %2 {
      %cst_36 = arith.constant 0.000000e+00 : f32
      %57 = vector.broadcast %cst_36 : f32 to vector<32x128xf32>
      %c0_37 = arith.constant 0 : index
      %c0_38 = arith.constant 0 : index
      %58 = vector.load %arg13[%c0_37, %c0_38] : memref<32x128xf32, #tpu.memory_space<vmem>>, vector<32x128xf32>
      tpu.vector_store %arg13[%c0_37, %c0_38], %57 {strides = array<i32>} : memref<32x128xf32, #tpu.memory_space<vmem>>, vector<32x128xf32>,
    } else {
    }
    %c0 = arith.constant 0 : index
    %c0_1 = arith.constant 0 : index
    %c0_2 = arith.constant 0 : index
    %3 = vector.load %arg2[%c0, %c0_1, %c0_2] : memref<2x16x128xf32, #tpu.memory_space<vmem>>, vector<2x16x128xf32>
    %4 = vector.shape_cast %3 : vector<2x16x128xf32> to vector<32x128xf32>
    %5 = arith.truncf %4 : vector<32x128xf32> to vector<32x128xbf16>
    %c0_3 = arith.constant 0 : index
    %c0_4 = arith.constant 0 : index
    %c0_5 = arith.constant 0 : index
    %6 = vector.load %arg3[%c0_3, %c0_4, %c0_5] : memref<1x128x32xbf16, #tpu.memory_space<vmem>>, vector<1x128x32xbf16>
    %7 = vector.shape_cast %6 : vector<1x128x32xbf16> to vector<128x32xbf16>
    %cst = arith.constant dense<0.000000e+00> : vector<32x32xf32>
    %8 = tpu.matmul %5, %7, %cst {dimension_numbers = #tpu.dot_dimension_numbers<[1], [0], [0], [1], [0, 0, 1, 1], [], []>} : vector<32x128xbf16>, vector<128x32xbf16>, vector<32x32xf32> -> vector<32x32xf32>
    %c0_6 = arith.constant 0 : index
    %c0_7 = arith.constant 0 : index
    %c0_8 = arith.constant 0 : index
    %9 = vector.load %arg6[%c0_6, %c0_7, %c0_8] : memref<1x1x32xf32, #tpu.memory_space<vmem>>, vector<1x1x32xf32>
    %10 = vector.shape_cast %9 : vector<1x1x32xf32> to vector<1x32xf32>
    %11 = vector.broadcast %10 : vector<1x32xf32> to vector<32x32xf32>
    %12 = arith.addf %8, %11 : vector<32x32xf32>
    %c0_9 = arith.constant 0 : index
    %c0_10 = arith.constant 0 : index
    %c0_11 = arith.constant 0 : index
    %13 = vector.load %arg4[%c0_9, %c0_10, %c0_11] : memref<1x128x32xbf16, #tpu.memory_space<vmem>>, vector<1x128x32xbf16>
    %14 = vector.shape_cast %13 : vector<1x128x32xbf16> to vector<128x32xbf16>
    %cst_12 = arith.constant dense<0.000000e+00> : vector<32x32xf32>
    %15 = tpu.matmul %5, %14, %cst_12 {dimension_numbers = #tpu.dot_dimension_numbers<[1], [0], [0], [1], [0, 0, 1, 1], [], []>} : vector<32x128xbf16>, vector<128x32xbf16>, vector<32x32xf32> -> vector<32x32xf32>
    %c0_13 = arith.constant 0 : index
    %c0_14 = arith.constant 0 : index
    %c0_15 = arith.constant 0 : index
    %16 = vector.load %arg7[%c0_13, %c0_14, %c0_15] : memref<1x1x32xf32, #tpu.memory_space<vmem>>, vector<1x1x32xf32>
    %17 = vector.shape_cast %16 : vector<1x1x32xf32> to vector<1x32xf32>
    %18 = vector.broadcast %17 : vector<1x32xf32> to vector<32x32xf32>
    %19 = arith.addf %15, %18 : vector<32x32xf32>
    %c0_16 = arith.constant 0 : index
    %c0_17 = arith.constant 0 : index
    %c0_18 = arith.constant 0 : index
    %20 = vector.load %arg5[%c0_16, %c0_17, %c0_18] : memref<1x128x32xbf16, #tpu.memory_space<vmem>>, vector<1x128x32xbf16>
    %21 = vector.shape_cast %20 : vector<1x128x32xbf16> to vector<128x32xbf16>
    %cst_19 = arith.constant dense<0.000000e+00> : vector<32x32xf32>
    %22 = tpu.matmul %5, %21, %cst_19 {dimension_numbers = #tpu.dot_dimension_numbers<[1], [0], [0], [1], [0, 0, 1, 1], [], []>} : vector<32x128xbf16>, vector<128x32xbf16>, vector<32x32xf32> -> vector<32x32xf32>
    %c0_20 = arith.constant 0 : index
    %c0_21 = arith.constant 0 : index
    %c0_22 = arith.constant 0 : index
    %23 = vector.load %arg8[%c0_20, %c0_21, %c0_22] : memref<1x1x32xf32, #tpu.memory_space<vmem>>, vector<1x1x32xf32>
    %24 = vector.shape_cast %23 : vector<1x1x32xf32> to vector<1x32xf32>
    %25 = vector.broadcast %24 : vector<1x32xf32> to vector<32x32xf32>
    %26 = arith.addf %22, %25 : vector<32x32xf32>
    %27 = vector.shape_cast %12 : vector<32x32xf32> to vector<2x16x32xf32>
    %28 = arith.truncf %27 : vector<2x16x32xf32> to vector<2x16x32xbf16>
    %29 = vector.shape_cast %19 : vector<32x32xf32> to vector<2x16x32xf32>
    %30 = arith.truncf %29 : vector<2x16x32xf32> to vector<2x16x32xbf16>
    %31 = vector.shape_cast %26 : vector<32x32xf32> to vector<2x16x32xf32>
    %32 = arith.truncf %31 : vector<2x16x32xf32> to vector<2x16x32xbf16>
    "tpu.trace_start"() <{level = 10 : i32, message = "bqd,bkd->bqk"}> : () -> ()
    %cst_23 = arith.constant dense<0.000000e+00> : vector<2x16x16xf32>
    %33 = tpu.matmul %28, %30, %cst_23 {dimension_numbers = #tpu.dot_dimension_numbers<[2], [2], [1], [1], [0, 0, 0, 1, 1, 1], [0], [0]>} : vector<2x16x32xbf16>, vector<2x16x32xbf16>, vector<2x16x16xf32> -> vector<2x16x16xf32>
    "tpu.trace_stop"() : () -> ()
    %cst_24 = arith.constant dense<0xFF800000> : vector<2x16xf32>
    %34 = vector.multi_reduction <maximumf>, %33, %cst_24 [2] : vector<2x16x16xf32> to vector<2x16xf32>
    %35 = vector.shape_cast %34 : vector<2x16xf32> to vector<2x16x1xf32>
    %36 = vector.broadcast %35 : vector<2x16x1xf32> to vector<2x16x16xf32>
    %37 = arith.subf %33, %36 : vector<2x16x16xf32>
    %38 = math.exp %37 : vector<2x16x16xf32>
    %cst_25 = arith.constant dense<0.000000e+00> : vector<2x16xf32>
    %39 = vector.multi_reduction <add>, %38, %cst_25 [2] : vector<2x16x16xf32> to vector<2x16xf32>
    %40 = vector.shape_cast %39 : vector<2x16xf32> to vector<2x16x1xf32>
    %41 = tpu.reciprocal %40 {approx = true} : vector<2x16x1xf32> -> vector<2x16x1xf32>
    %42 = vector.broadcast %41 : vector<2x16x1xf32> to vector<2x16x16xf32>
    %43 = arith.mulf %38, %42 : vector<2x16x16xf32>
    %44 = arith.truncf %43 : vector<2x16x16xf32> to vector<2x16x16xbf16>
    "tpu.trace_start"() <{level = 10 : i32, message = "bqk,bkd->bqd"}> : () -> ()
    %cst_26 = arith.constant dense<0.000000e+00> : vector<2x16x32xf32>
    %45 = tpu.matmul %44, %32, %cst_26 {dimension_numbers = #tpu.dot_dimension_numbers<[2], [1], [1], [2], [0, 0, 0, 1, 1, 2], [0], [0]>} : vector<2x16x16xbf16>, vector<2x16x32xbf16>, vector<2x16x32xf32> -> vector<2x16x32xf32>
    "tpu.trace_stop"() : () -> ()
    %c0_27 = arith.constant 0 : index
    %c0_28 = arith.constant 0 : index
    %46 = vector.load %arg13[%c0_27, %c0_28] : memref<32x128xf32, #tpu.memory_space<vmem>>, vector<32x128xf32>
    %47 = vector.shape_cast %45 : vector<2x16x32xf32> to vector<32x32xf32>
    %48 = arith.truncf %47 : vector<32x32xf32> to vector<32x32xbf16>
    %c0_29 = arith.constant 0 : index
    %c0_30 = arith.constant 0 : index
    %c0_31 = arith.constant 0 : index
    %49 = vector.load %arg9[%c0_29, %c0_30, %c0_31] : memref<1x32x128xbf16, #tpu.memory_space<vmem>>, vector<1x32x128xbf16>
    %50 = vector.shape_cast %49 : vector<1x32x128xbf16> to vector<32x128xbf16>
    %cst_32 = arith.constant dense<0.000000e+00> : vector<32x128xf32>
    %51 = tpu.matmul %48, %50, %cst_32 {dimension_numbers = #tpu.dot_dimension_numbers<[1], [0], [0], [1], [0, 0, 1, 1], [], []>} : vector<32x32xbf16>, vector<32x128xbf16>, vector<32x128xf32> -> vector<32x128xf32>
    %52 = arith.addf %46, %51 : vector<32x128xf32>
    %c0_33 = arith.constant 0 : index
    %c0_34 = arith.constant 0 : index
    %53 = vector.load %arg13[%c0_33, %c0_34] : memref<32x128xf32, #tpu.memory_space<vmem>>, vector<32x128xf32>
    tpu.vector_store %arg13[%c0_33, %c0_34], %52 {strides = array<i32>} : memref<32x128xf32, #tpu.memory_space<vmem>>, vector<32x128xf32>,
    %c3_i32 = arith.constant 3 : i32
    %54 = arith.cmpi eq, %arg1, %c3_i32 : i32
    %55 = arith.extui %54 : i1 to i32
    %c0_i32_35 = arith.constant 0 : i32
    %56 = arith.cmpi ne, %55, %c0_i32_35 : i32
    scf.if %56 {
      %c0_36 = arith.constant 0 : index
      %c0_37 = arith.constant 0 : index
      %57 = vector.load %arg13[%c0_36, %c0_37] : memref<32x128xf32, #tpu.memory_space<vmem>>, vector<32x128xf32>
      %c0_38 = arith.constant 0 : index
      %c0_39 = arith.constant 0 : index
      %58 = vector.load %arg10[%c0_38, %c0_39] : memref<1x128xf32, #tpu.memory_space<vmem>>, vector<1x128xf32>
      %59 = vector.broadcast %58 : vector<1x128xf32> to vector<32x128xf32>
      %60 = arith.addf %57, %59 : vector<32x128xf32>
      %61 = arith.addf %60, %4 : vector<32x128xf32>
      %62 = arith.truncf %61 : vector<32x128xf32> to vector<32x128xbf16>
      %c0_40 = arith.constant 0 : index
      %c0_41 = arith.constant 0 : index
      %63 = vector.load %arg11[%c0_40, %c0_41] : memref<128x128xbf16, #tpu.memory_space<vmem>>, vector<128x128xbf16>
      %cst_42 = arith.constant dense<0.000000e+00> : vector<32x128xf32>
      %64 = tpu.matmul %62, %63, %cst_42 {dimension_numbers = #tpu.dot_dimension_numbers<[1], [0], [0], [1], [0, 0, 1, 1], [], []>} : vector<32x128xbf16>, vector<128x128xbf16>, vector<32x128xf32> -> vector<32x128xf32>
      %65 = arith.addf %64, %61 : vector<32x128xf32>
      %66 = vector.shape_cast %65 : vector<32x128xf32> to vector<2x16x128xf32>
      %c0_43 = arith.constant 0 : index
      %c0_44 = arith.constant 0 : index
      %c0_45 = arith.constant 0 : index
      %67 = vector.load %arg12[%c0_43, %c0_44, %c0_45] : memref<2x16x128xf32, #tpu.memory_space<vmem>>, vector<2x16x128xf32>
      tpu.vector_store %arg12[%c0_43, %c0_44, %c0_45], %66 {strides = array<i32>} : memref<2x16x128xf32, #tpu.memory_space<vmem>>, vector<2x16x128xf32>,
    } else {
    }
    return
  }
  func.func @transform_0(%arg0: i32, %arg1: i32) -> (i32, i32, i32) {
    %c0_i32 = arith.constant 0 : i32
    %c0_i32_0 = arith.constant 0 : i32
    %c0_i32_1 = arith.constant 0 : i32
    return %arg0, %c0_i32, %c0_i32_0 : i32, i32, i32
  }
  func.func @transform_1(%arg0: i32, %arg1: i32) -> (i32, i32, i32) {
    %c0_i32 = arith.constant 0 : i32
    %c0_i32_0 = arith.constant 0 : i32
    %c0_i32_1 = arith.constant 0 : i32
    return %arg1, %c0_i32, %c0_i32_0 : i32, i32, i32
  }
  func.func @transform_2(%arg0: i32, %arg1: i32) -> (i32, i32, i32) {
    %c0_i32 = arith.constant 0 : i32
    %c0_i32_0 = arith.constant 0 : i32
    %c0_i32_1 = arith.constant 0 : i32
    return %arg1, %c0_i32, %c0_i32_0 : i32, i32, i32
  }
  func.func @transform_3(%arg0: i32, %arg1: i32) -> (i32, i32, i32) {
    %c0_i32 = arith.constant 0 : i32
    %c0_i32_0 = arith.constant 0 : i32
    %c0_i32_1 = arith.constant 0 : i32
    return %arg1, %c0_i32, %c0_i32_0 : i32, i32, i32
  }
  func.func @transform_4(%arg0: i32, %arg1: i32) -> (i32, i32, i32) {
    %c0_i32 = arith.constant 0 : i32
    %c0_i32_0 = arith.constant 0 : i32
    %c0_i32_1 = arith.constant 0 : i32
    return %arg1, %c0_i32, %c0_i32_0 : i32, i32, i32
  }
  func.func @transform_5(%arg0: i32, %arg1: i32) -> (i32, i32, i32) {
    %c0_i32 = arith.constant 0 : i32
    %c0_i32_0 = arith.constant 0 : i32
    %c0_i32_1 = arith.constant 0 : i32
    return %arg1, %c0_i32, %c0_i32_0 : i32, i32, i32
  }
  func.func @transform_6(%arg0: i32, %arg1: i32) -> (i32, i32, i32) {
    %c0_i32 = arith.constant 0 : i32
    %c0_i32_0 = arith.constant 0 : i32
    %c0_i32_1 = arith.constant 0 : i32
    return %arg1, %c0_i32, %c0_i32_0 : i32, i32, i32
  }
  func.func @transform_7(%arg0: i32, %arg1: i32) -> (i32, i32, i32) {
    %c0_i32 = arith.constant 0 : i32
    %c0_i32_0 = arith.constant 0 : i32
    %c0_i32_1 = arith.constant 0 : i32
    return %arg1, %c0_i32, %c0_i32_0 : i32, i32, i32
  }
  func.func @transform_8(%arg0: i32, %arg1: i32) -> (i32, i32) {
    %c0_i32 = arith.constant 0 : i32
    %c0_i32_0 = arith.constant 0 : i32
    %c0_i32_1 = arith.constant 0 : i32
    return %c0_i32, %c0_i32_0 : i32, i32
  }
  func.func @transform_9(%arg0: i32, %arg1: i32) -> (i32, i32) {
    %c0_i32 = arith.constant 0 : i32
    %c0_i32_0 = arith.constant 0 : i32
    %c0_i32_1 = arith.constant 0 : i32
    return %c0_i32, %c0_i32_0 : i32, i32
  }
  func.func @transform_10(%arg0: i32, %arg1: i32) -> (i32, i32, i32) {
    %c0_i32 = arith.constant 0 : i32
    %c0_i32_0 = arith.constant 0 : i32
    %c0_i32_1 = arith.constant 0 : i32
    return %arg0, %c0_i32, %c0_i32_0 : i32, i32, i32
  }
}

</mosaic_0001>

<llo_original>
// kernel: tpu_custom_call.1
$region0: #{tpu_custom_call.1}
  #allocation0 [shape = 'u32[]', space=smem, size = 0x4, offset = 0x4, fixed_abs, tag = 'smem constant byte address 0x4 - core index']
  #allocation1 [shape = 'u32[144,128]{1,0:T(1,128)}', space=vmem, size = 0x12000, scoped, tag = 'internal scratch']
  #allocation2 [shape = 'f32[32,128]{1,0:T(8,128)}', space=vmem, size = 0x4000, scoped, tag = 'scratch operand']
  %s0 = inlined_call_operand.vmem [shape: f32[4,16,128], index: 0, kind: input, shape index: {}]
  %s1 = inlined_call_operand.vmem [shape: bf16[4,128,32], index: 1, kind: input, shape index: {}]
  %s2 = inlined_call_operand.vmem [shape: bf16[4,128,32], index: 2, kind: input, shape index: {}]
  %s3 = inlined_call_operand.vmem [shape: bf16[4,128,32], index: 3, kind: input, shape index: {}]
  %s4 = inlined_call_operand.vmem [shape: f32[4,1,32], index: 4, kind: input, shape index: {}]
  %s5 = inlined_call_operand.vmem [shape: f32[4,1,32], index: 5, kind: input, shape index: {}]
  %s6 = inlined_call_operand.vmem [shape: f32[4,1,32], index: 6, kind: input, shape index: {}]
  %s7 = inlined_call_operand.vmem [shape: bf16[4,32,128], index: 7, kind: input, shape index: {}]
  %s8 = inlined_call_operand.vmem [shape: f32[1,128], index: 8, kind: input, shape index: {}]
  %s9 = inlined_call_operand.vmem [shape: bf16[128,128], index: 9, kind: input, shape index: {}]
  %s10 = inlined_call_operand.hbm [shape: f32[4,16,128], index: 10, kind: output, shape index: {}]
  %s11 = sld [smem:[#allocation0]]
  $region81: #{tpu_custom_call.1} parent=0
    _
  %s13 = ssub.s32 1, %s11
  %s14 = scalar_select 0, %s13, %s11
  $region1: #{tpu_custom_call.1} parent=0
    #allocation3 [shape = 'u8[32768]{0}', space=vmem, size = 0x8000, scoped, tag = 'output window, operand 0']
    #allocation4 [shape = 's32[2]{0}', space=sflag, size = 0x8, scoped, tag = 'scoped memory for tpu_custom_call.1']
    %15 = vsyncpa [#allocation4], 0
    %s16 = scalar_lea.sflag [#allocation4], 1
    %17 = vsyncpa %s16, 0
    loop: start=0, step=1, limit=10
    $region2: #{tpu_custom_call.1} parent=1 // loop_pre_header
      _
    $region3: #{tpu_custom_call.1} parent=1 // loop_header
      %s19 = sphi 0, %s23
      %p20 = scmp.ge.s32.totalorder %s19, 10
      %s26 = sphi 0, %s38
      %s27 = sphi 0, %s34
      %s28 = sphi 0, %s26
      %s29 = sphi 0, %s27
      %s30 = sphi 0, %s28
      %s31 = sphi 0, %s29
      %s41 = sphi 0, %s43
      %s44 = sphi 0, %s41
      %s45 = sphi 0, %s44
      %s61 = sphi 0, %s45
      %s67 = sphi 0, %s69
      %s70 = sphi 0, %s67
      %s71 = sphi 0, %s70
      %s87 = sphi 0, %s71
      %s93 = sphi 0, %s95
      %s96 = sphi 0, %s93
      %s97 = sphi 0, %s96
      %s113 = sphi 0, %s97
      %s119 = sphi 0, %s121
      %s122 = sphi 0, %s119
      %s123 = sphi 0, %s122
      %s139 = sphi 0, %s123
      %s145 = sphi 0, %s147
      %s148 = sphi 0, %s145
      %s149 = sphi 0, %s148
      %s165 = sphi 0, %s149
      %s171 = sphi 0, %s173
      %s174 = sphi 0, %s171
      %s175 = sphi 0, %s174
      %s191 = sphi 0, %s175
      %s197 = sphi 0, %s199
      %s200 = sphi 0, %s197
      %s201 = sphi 0, %s200
      %s217 = sphi 0, %s201
      %s223 = sphi 0, %s225
      %s226 = sphi 0, %s223
      %s227 = sphi 0, %s226
      %s243 = sphi 0, %s227
      %s247 = sphi 0, %s247
      %s249 = sphi 0, %s247
      %s250 = sphi 0, %s249
      %s264 = sphi 0, %s250
      %s268 = sphi 0, %s268
      %s270 = sphi 0, %s268
      %s271 = sphi 0, %s270
      %s285 = sphi 0, %s271
      %s291 = sphi 0, %s293
      %s294 = sphi 0, %s291
      %s295 = sphi 0, %s294
      %s311 = sphi 0, %s295
    $region4: #{tpu_custom_call.1} parent=1 // loop_header_branch
      %22 = sbr.rel (%p20) target = $region8
    $region5: #{tpu_custom_call.1} parent=1 // loop_body
      %s24 = ssub.s32 %s19, 1
      %s25 = ssub.s32 %s19, 2
      %s32 = sadd.s32 1, %s27
      %p33 = scmp.ge.s32.totalorder %s32, 4
      %s34 = scalar_select %p33, 0, %s32
      %s35 = sadd.s32 1, %s26
      %s36 = scalar_select %p33, %s35, %s26
      %p37 = scmp.ge.s32.totalorder %s36, 2
      %s38 = scalar_select %p37, 0, %s36
      %s39 = ssub.s32 %s26, %s38
      %p40 = scmp.eq.s32.totalorder %s39, 0
      %s42 = sadd.s32 %s41, 1
      %s43 = scalar_select %p40, %s41, %s42
      %p46 = pneg %p40
      %p47 = scmp.eq.s32.totalorder %s19, 7
      %p48 = por %p46, %p47
      %p49 = scmp.ne.s32.totalorder %s41, %s44
      %p50 = scmp.eq.s32.totalorder %s19, 0
      %p51 = por %p49, %p50
      %p52 = scmp.ne.s32.totalorder %s41, %s44
      %p53 = scmp.eq.s32.totalorder %s24, 7
      %p54 = por %p52, %p53
      %p55 = scmp.ne.s32.totalorder %s44, %s45
      %p56 = scmp.eq.s32.totalorder %s24, 0
      %p57 = por %p55, %p56
      %p58 = scmp.ne.s32.totalorder %s44, %s45
      %p59 = scmp.eq.s32.totalorder %s25, 7
      %p60 = por %p58, %p59
      %p62 = scmp.ne.s32.totalorder %s45, %s61
      %p63 = scmp.eq.s32.totalorder %s25, 0
      %p64 = por %p62, %p63
      %s65 = ssub.s32 %s27, %s34
      %p66 = scmp.eq.s32.totalorder %s65, 0
      %s68 = sadd.s32 %s67, 1
      %s69 = scalar_select %p66, %s67, %s68
      %p72 = pneg %p66
      %p73 = scmp.eq.s32.totalorder %s19, 7
      %p74 = por %p72, %p73
      %p75 = scmp.ne.s32.totalorder %s67, %s70
      %p76 = scmp.eq.s32.totalorder %s19, 0
      %p77 = por %p75, %p76
      %p78 = scmp.ne.s32.totalorder %s67, %s70
      %p79 = scmp.eq.s32.totalorder %s24, 7
      %p80 = por %p78, %p79
      %p81 = scmp.ne.s32.totalorder %s70, %s71
      %p82 = scmp.eq.s32.totalorder %s24, 0
      %p83 = por %p81, %p82
      %p84 = scmp.ne.s32.totalorder %s70, %s71
      %p85 = scmp.eq.s32.totalorder %s25, 7
      %p86 = por %p84, %p85
      %p88 = scmp.ne.s32.totalorder %s71, %s87
      %p89 = scmp.eq.s32.totalorder %s25, 0
      %p90 = por %p88, %p89
      %s91 = ssub.s32 %s27, %s34
      %p92 = scmp.eq.s32.totalorder %s91, 0
      %s94 = sadd.s32 %s93, 1
      %s95 = scalar_select %p92, %s93, %s94
      %p98 = pneg %p92
      %p99 = scmp.eq.s32.totalorder %s19, 7
      %p100 = por %p98, %p99
      %p101 = scmp.ne.s32.totalorder %s93, %s96
      %p102 = scmp.eq.s32.totalorder %s19, 0
      %p103 = por %p101, %p102
      %p104 = scmp.ne.s32.totalorder %s93, %s96
      %p105 = scmp.eq.s32.totalorder %s24, 7
      %p106 = por %p104, %p105
      %p107 = scmp.ne.s32.totalorder %s96, %s97
      %p108 = scmp.eq.s32.totalorder %s24, 0
      %p109 = por %p107, %p108
      %p110 = scmp.ne.s32.totalorder %s96, %s97
      %p111 = scmp.eq.s32.totalorder %s25, 7
      %p112 = por %p110, %p111
      %p114 = scmp.ne.s32.totalorder %s97, %s113
      %p115 = scmp.eq.s32.totalorder %s25, 0
      %p116 = por %p114, %p115
      %s117 = ssub.s32 %s27, %s34
      %p118 = scmp.eq.s32.totalorder %s117, 0
      %s120 = sadd.s32 %s119, 1
      %s121 = scalar_select %p118, %s119, %s120
      %p124 = pneg %p118
      %p125 = scmp.eq.s32.totalorder %s19, 7
      %p126 = por %p124, %p125
      %p127 = scmp.ne.s32.totalorder %s119, %s122
      %p128 = scmp.eq.s32.totalorder %s19, 0
      %p129 = por %p127, %p128
      %p130 = scmp.ne.s32.totalorder %s119, %s122
      %p131 = scmp.eq.s32.totalorder %s24, 7
      %p132 = por %p130, %p131
      %p133 = scmp.ne.s32.totalorder %s122, %s123
      %p134 = scmp.eq.s32.totalorder %s24, 0
      %p135 = por %p133, %p134
      %p136 = scmp.ne.s32.totalorder %s122, %s123
      %p137 = scmp.eq.s32.totalorder %s25, 7
      %p138 = por %p136, %p137
      %p140 = scmp.ne.s32.totalorder %s123, %s139
      %p141 = scmp.eq.s32.totalorder %s25, 0
      %p142 = por %p140, %p141
      %s143 = ssub.s32 %s27, %s34
      %p144 = scmp.eq.s32.totalorder %s143, 0
      %s146 = sadd.s32 %s145, 1
      %s147 = scalar_select %p144, %s145, %s146
      %p150 = pneg %p144
      %p151 = scmp.eq.s32.totalorder %s19, 7
      %p152 = por %p150, %p151
      %p153 = scmp.ne.s32.totalorder %s145, %s148
      %p154 = scmp.eq.s32.totalorder %s19, 0
      %p155 = por %p153, %p154
      %p156 = scmp.ne.s32.totalorder %s145, %s148
      %p157 = scmp.eq.s32.totalorder %s24, 7
      %p158 = por %p156, %p157
      %p159 = scmp.ne.s32.totalorder %s148, %s149
      %p160 = scmp.eq.s32.totalorder %s24, 0
      %p161 = por %p159, %p160
      %p162 = scmp.ne.s32.totalorder %s148, %s149
      %p163 = scmp.eq.s32.totalorder %s25, 7
      %p164 = por %p162, %p163
      %p166 = scmp.ne.s32.totalorder %s149, %s165
      %p167 = scmp.eq.s32.totalorder %s25, 0
      %p168 = por %p166, %p167
      %s169 = ssub.s32 %s27, %s34
      %p170 = scmp.eq.s32.totalorder %s169, 0
      %s172 = sadd.s32 %s171, 1
      %s173 = scalar_select %p170, %s171, %s172
      %p176 = pneg %p170
      %p177 = scmp.eq.s32.totalorder %s19, 7
      %p178 = por %p176, %p177
      %p179 = scmp.ne.s32.totalorder %s171, %s174
      %p180 = scmp.eq.s32.totalorder %s19, 0
      %p181 = por %p179, %p180
      %p182 = scmp.ne.s32.totalorder %s171, %s174
      %p183 = scmp.eq.s32.totalorder %s24, 7
      %p184 = por %p182, %p183
      %p185 = scmp.ne.s32.totalorder %s174, %s175
      %p186 = scmp.eq.s32.totalorder %s24, 0
      %p187 = por %p185, %p186
      %p188 = scmp.ne.s32.totalorder %s174, %s175
      %p189 = scmp.eq.s32.totalorder %s25, 7
      %p190 = por %p188, %p189
      %p192 = scmp.ne.s32.totalorder %s175, %s191
      %p193 = scmp.eq.s32.totalorder %s25, 0
      %p194 = por %p192, %p193
      %s195 = ssub.s32 %s27, %s34
      %p196 = scmp.eq.s32.totalorder %s195, 0
      %s198 = sadd.s32 %s197, 1
      %s199 = scalar_select %p196, %s197, %s198
      %p202 = pneg %p196
      %p203 = scmp.eq.s32.totalorder %s19, 7
      %p204 = por %p202, %p203
      %p205 = scmp.ne.s32.totalorder %s197, %s200
      %p206 = scmp.eq.s32.totalorder %s19, 0
      %p207 = por %p205, %p206
      %p208 = scmp.ne.s32.totalorder %s197, %s200
      %p209 = scmp.eq.s32.totalorder %s24, 7
      %p210 = por %p208, %p209
      %p211 = scmp.ne.s32.totalorder %s200, %s201
      %p212 = scmp.eq.s32.totalorder %s24, 0
      %p213 = por %p211, %p212
      %p214 = scmp.ne.s32.totalorder %s200, %s201
      %p215 = scmp.eq.s32.totalorder %s25, 7
      %p216 = por %p214, %p215
      %p218 = scmp.ne.s32.totalorder %s201, %s217
      %p219 = scmp.eq.s32.totalorder %s25, 0
      %p220 = por %p218, %p219
      %s221 = ssub.s32 %s27, %s34
      %p222 = scmp.eq.s32.totalorder %s221, 0
      %s224 = sadd.s32 %s223, 1
      %s225 = scalar_select %p222, %s223, %s224
      %p228 = pneg %p222
      %p229 = scmp.eq.s32.totalorder %s19, 7
      %p230 = por %p228, %p229
      %p231 = scmp.ne.s32.totalorder %s223, %s226
      %p232 = scmp.eq.s32.totalorder %s19, 0
      %p233 = por %p231, %p232
      %p234 = scmp.ne.s32.totalorder %s223, %s226
      %p235 = scmp.eq.s32.totalorder %s24, 7
      %p236 = por %p234, %p235
      %p237 = scmp.ne.s32.totalorder %s226, %s227
      %p238 = scmp.eq.s32.totalorder %s24, 0
      %p239 = por %p237, %p238
      %p240 = scmp.ne.s32.totalorder %s226, %s227
      %p241 = scmp.eq.s32.totalorder %s25, 7
      %p242 = por %p240, %p241
      %p244 = scmp.ne.s32.totalorder %s227, %s243
      %p245 = scmp.eq.s32.totalorder %s25, 0
      %p246 = por %p244, %p245
      %s248 = sadd.s32 %s247, 1
      %p251 = scmp.eq.s32.totalorder %s19, 7
      %p252 = scmp.ne.s32.totalorder %s247, %s249
      %p253 = scmp.eq.s32.totalorder %s19, 0
      %p254 = por %p252, %p253
      %p255 = scmp.ne.s32.totalorder %s247, %s249
      %p256 = scmp.eq.s32.totalorder %s24, 7
      %p257 = por %p255, %p256
      %p258 = scmp.ne.s32.totalorder %s249, %s250
      %p259 = scmp.eq.s32.totalorder %s24, 0
      %p260 = por %p258, %p259
      %p261 = scmp.ne.s32.totalorder %s249, %s250
      %p262 = scmp.eq.s32.totalorder %s25, 7
      %p263 = por %p261, %p262
      %p265 = scmp.ne.s32.totalorder %s250, %s264
      %p266 = scmp.eq.s32.totalorder %s25, 0
      %p267 = por %p265, %p266
      %s269 = sadd.s32 %s268, 1
      %p272 = scmp.eq.s32.totalorder %s19, 7
      %p273 = scmp.ne.s32.totalorder %s268, %s270
      %p274 = scmp.eq.s32.totalorder %s19, 0
      %p275 = por %p273, %p274
      %p276 = scmp.ne.s32.totalorder %s268, %s270
      %p277 = scmp.eq.s32.totalorder %s24, 7
      %p278 = por %p276, %p277
      %p279 = scmp.ne.s32.totalorder %s270, %s271
      %p280 = scmp.eq.s32.totalorder %s24, 0
      %p281 = por %p279, %p280
      %p282 = scmp.ne.s32.totalorder %s270, %s271
      %p283 = scmp.eq.s32.totalorder %s25, 7
      %p284 = por %p282, %p283
      %p286 = scmp.ne.s32.totalorder %s271, %s285
      %p287 = scmp.eq.s32.totalorder %s25, 0
      %p288 = por %p286, %p287
      %s289 = ssub.s32 %s26, %s38
      %p290 = scmp.eq.s32.totalorder %s289, 0
      %s292 = sadd.s32 %s291, 1
      %s293 = scalar_select %p290, %s291, %s292
      %p296 = pneg %p290
      %p297 = scmp.eq.s32.totalorder %s19, 7
      %p298 = por %p296, %p297
      %p299 = scmp.ne.s32.totalorder %s291, %s294
      %p300 = scmp.eq.s32.totalorder %s19, 0
      %p301 = por %p299, %p300
      %p302 = scmp.ne.s32.totalorder %s291, %s294
      %p303 = scmp.eq.s32.totalorder %s24, 7
      %p304 = por %p302, %p303
      %p305 = scmp.ne.s32.totalorder %s294, %s295
      %p306 = scmp.eq.s32.totalorder %s24, 0
      %p307 = por %p305, %p306
      %p308 = scmp.ne.s32.totalorder %s294, %s295
      %p309 = scmp.eq.s32.totalorder %s25, 7
      %p310 = por %p308, %p309
      %p312 = scmp.ne.s32.totalorder %s295, %s311
      %p313 = scmp.eq.s32.totalorder %s25, 0
      %p314 = por %p312, %p313
      %p315 = scmp.le.s32.totalorder 1, %s19
      %p316 = scmp.lt.s32.totalorder %s19, 9
      %p317 = pnand %p315, %p316
      %p318 = pneg %p317
      // Predicated region
      $region9: #{tpu_custom_call.1} parent=5 // pred_check
        _
      $region10: #{tpu_custom_call.1} parent=5 // pred_check_branch
        %320 = sbr.rel (%p317) target = $region12
      $region11: #{tpu_custom_call.1} parent=5 // pred_region
        %s321 = ssub.s32 %s19, 1
        // Predicated region
        $region13: #{tpu_custom_call.1} parent=11 // pred_check
          %p322 = pneg %p260
        $region14: #{tpu_custom_call.1} parent=11 // pred_check_branch
          %324 = sbr.rel (%p322) target = $region16
        $region15: #{tpu_custom_call.1} parent=11 // pred_region
          _
        $region16: #{tpu_custom_call.1} parent=11 // pred_fallthru
          _
        // Predicated region
        $region17: #{tpu_custom_call.1} parent=11 // pred_check
          %p325 = pneg %p281
        $region18: #{tpu_custom_call.1} parent=11 // pred_check_branch
          %327 = sbr.rel (%p325) target = $region20
        $region19: #{tpu_custom_call.1} parent=11 // pred_region
          _
        $region20: #{tpu_custom_call.1} parent=11 // pred_fallthru
          _
      $region12: #{tpu_custom_call.1} parent=5 // pred_fallthru
        _
      %p328 = scmp.lt.s32.totalorder %s19, 8
      // Predicated region
      $region21: #{tpu_custom_call.1} parent=5 // pred_check
        %p329 = pneg %p328
      $region22: #{tpu_custom_call.1} parent=5 // pred_check_branch
        %331 = sbr.rel (%p329) target = $region24
      $region23: #{tpu_custom_call.1} parent=5 // pred_region
        // Predicated region
        $region25: #{tpu_custom_call.1} parent=23 // pred_check
          %p332 = pneg %p51
        $region26: #{tpu_custom_call.1} parent=23 // pred_check_branch
          %334 = sbr.rel (%p332) target = $region28
        $region27: #{tpu_custom_call.1} parent=23 // pred_region
          %s335 = smul.u32 2, %s26
          %p336 = scmp.lt.s32.totalorder %s335, 3
          %s337 = scalar_select %p336, %s335, 3
          %s338 = smul.addr %s337, 2
          %s339 = smul.addr %s338, 8
          %s340 = scalar_lea.vmem %s0, %s339
          %s341 = smul.u32 2, %s26
        $region28: #{tpu_custom_call.1} parent=23 // pred_fallthru
          _
        // Predicated region
        $region29: #{tpu_custom_call.1} parent=23 // pred_check
          %p342 = pneg %p77
        $region30: #{tpu_custom_call.1} parent=23 // pred_check_branch
          %344 = sbr.rel (%p342) target = $region32
        $region31: #{tpu_custom_call.1} parent=23 // pred_region
          %p345 = scmp.lt.s32.totalorder %s27, 3
          %s346 = scalar_select %p345, %s27, 3
          %s347 = smul.addr %s346, 16
          %s348 = smul.addr %s347, 4
          %s349 = scalar_lea.vmem %s1, %s348
        $region32: #{tpu_custom_call.1} parent=23 // pred_fallthru
          _
        // Predicated region
        $region33: #{tpu_custom_call.1} parent=23 // pred_check
          %p350 = pneg %p103
        $region34: #{tpu_custom_call.1} parent=23 // pred_check_branch
          %352 = sbr.rel (%p350) target = $region36
        $region35: #{tpu_custom_call.1} parent=23 // pred_region
          %p353 = scmp.lt.s32.totalorder %s27, 3
          %s354 = scalar_select %p353, %s27, 3
          %s355 = smul.addr %s354, 16
          %s356 = smul.addr %s355, 4
          %s357 = scalar_lea.vmem %s2, %s356
        $region36: #{tpu_custom_call.1} parent=23 // pred_fallthru
          _
        // Predicated region
        $region37: #{tpu_custom_call.1} parent=23 // pred_check
          %p358 = pneg %p129
        $region38: #{tpu_custom_call.1} parent=23 // pred_check_branch
          %360 = sbr.rel (%p358) target = $region40
        $region39: #{tpu_custom_call.1} parent=23 // pred_region
          %p361 = scmp.lt.s32.totalorder %s27, 3
          %s362 = scalar_select %p361, %s27, 3
          %s363 = smul.addr %s362, 16
          %s364 = smul.addr %s363, 4
          %s365 = scalar_lea.vmem %s3, %s364
        $region40: #{tpu_custom_call.1} parent=23 // pred_fallthru
          _
        // Predicated region
        $region41: #{tpu_custom_call.1} parent=23 // pred_check
          %p366 = pneg %p155
        $region42: #{tpu_custom_call.1} parent=23 // pred_check_branch
          %368 = sbr.rel (%p366) target = $region44
        $region43: #{tpu_custom_call.1} parent=23 // pred_region
          %p369 = scmp.lt.s32.totalorder %s27, 3
          %s370 = scalar_select %p369, %s27, 3
          %s371 = scalar_lea.vmem %s4, %s370
        $region44: #{tpu_custom_call.1} parent=23 // pred_fallthru
          _
        // Predicated region
        $region45: #{tpu_custom_call.1} parent=23 // pred_check
          %p372 = pneg %p181
        $region46: #{tpu_custom_call.1} parent=23 // pred_check_branch
          %374 = sbr.rel (%p372) target = $region48
        $region47: #{tpu_custom_call.1} parent=23 // pred_region
          %p375 = scmp.lt.s32.totalorder %s27, 3
          %s376 = scalar_select %p375, %s27, 3
          %s377 = scalar_lea.vmem %s5, %s376
        $region48: #{tpu_custom_call.1} parent=23 // pred_fallthru
          _
        // Predicated region
        $region49: #{tpu_custom_call.1} parent=23 // pred_check
          %p378 = pneg %p207
        $region50: #{tpu_custom_call.1} parent=23 // pred_check_branch
          %380 = sbr.rel (%p378) target = $region52
        $region51: #{tpu_custom_call.1} parent=23 // pred_region
          %p381 = scmp.lt.s32.totalorder %s27, 3
          %s382 = scalar_select %p381, %s27, 3
          %s383 = scalar_lea.vmem %s6, %s382
        $region52: #{tpu_custom_call.1} parent=23 // pred_fallthru
          _
        // Predicated region
        $region53: #{tpu_custom_call.1} parent=23 // pred_check
          %p384 = pneg %p233
        $region54: #{tpu_custom_call.1} parent=23 // pred_check_branch
          %386 = sbr.rel (%p384) target = $region56
        $region55: #{tpu_custom_call.1} parent=23 // pred_region
          %p387 = scmp.lt.s32.totalorder %s27, 3
          %s388 = scalar_select %p387, %s27, 3
          %s389 = smul.addr %s388, 4
          %s390 = smul.addr %s389, 4
          %s391 = scalar_lea.vmem %s7, %s390
        $region56: #{tpu_custom_call.1} parent=23 // pred_fallthru
          _
      $region24: #{tpu_custom_call.1} parent=5 // pred_fallthru
        _
      %p392 = scmp.le.s32.totalorder 1, %s19
      %p393 = scmp.lt.s32.totalorder %s19, 9
      %p394 = pnand %p392, %p393
      %p395 = pneg %p394
      // Predicated region
      $region57: #{tpu_custom_call.1} parent=5 // pred_check
        _
      $region58: #{tpu_custom_call.1} parent=5 // pred_check_branch
        %397 = sbr.rel (%p394) target = $region60
      $region59: #{tpu_custom_call.1} parent=5 // pred_region
        %s398 = ssub.s32 %s19, 1
        %s399 = smul.u32 2, %s28
        %p400 = scmp.lt.s32.totalorder %s399, 3
        %s401 = scalar_select %p400, %s399, 3
        %s402 = smul.addr %s401, 2
        %s403 = smul.addr %s402, 8
        %s404 = scalar_lea.vmem %s0, %s403
        %p405 = pneg %p57
        %p406 = pneg %p54
        %p407 = scmp.lt.s32.totalorder %s29, 3
        %s408 = scalar_select %p407, %s29, 3
        %s409 = smul.addr %s408, 16
        %s410 = smul.addr %s409, 4
        %s411 = scalar_lea.vmem %s1, %s410
        %p412 = pneg %p83
        %p413 = pneg %p80
        %p414 = scmp.lt.s32.totalorder %s29, 3
        %s415 = scalar_select %p414, %s29, 3
        %s416 = smul.addr %s415, 16
        %s417 = smul.addr %s416, 4
        %s418 = scalar_lea.vmem %s2, %s417
        %p419 = pneg %p109
        %p420 = pneg %p106
        %p421 = scmp.lt.s32.totalorder %s29, 3
        %s422 = scalar_select %p421, %s29, 3
        %s423 = smul.addr %s422, 16
        %s424 = smul.addr %s423, 4
        %s425 = scalar_lea.vmem %s3, %s424
        %p426 = pneg %p135
        %p427 = pneg %p132
        %p428 = scmp.lt.s32.totalorder %s29, 3
        %s429 = scalar_select %p428, %s29, 3
        %s430 = scalar_lea.vmem %s4, %s429
        %p431 = pneg %p161
        %p432 = pneg %p158
        %p433 = scmp.lt.s32.totalorder %s29, 3
        %s434 = scalar_select %p433, %s29, 3
        %s435 = scalar_lea.vmem %s5, %s434
        %p436 = pneg %p187
        %p437 = pneg %p184
        %p438 = scmp.lt.s32.totalorder %s29, 3
        %s439 = scalar_select %p438, %s29, 3
        %s440 = scalar_lea.vmem %s6, %s439
        %p441 = pneg %p213
        %p442 = pneg %p210
        %p443 = scmp.lt.s32.totalorder %s29, 3
        %s444 = scalar_select %p443, %s29, 3
        %s445 = smul.addr %s444, 4
        %s446 = smul.addr %s445, 4
        %s447 = scalar_lea.vmem %s7, %s446
        %p448 = pneg %p239
        %p449 = pneg %p236
        %p450 = pneg %p260
        %p451 = pneg %p257
        %p452 = pneg %p281
        %p453 = pneg %p278
        %p454 = pneg %p307
        %p455 = pneg %p304
        %s456 = sand.u32 %s294, 1
        %s457 = scalar_lea.sflag [#allocation4], %s456
        %s458 = sand.u32 %s294, 1
        %s459 = smul.addr %s458, 32
        %s460 = scalar_lea.vmem [#allocation3], %s459
        %s461 = smul.u32 2, %s28
        %p462 = scmp.lt.s32.totalorder %s461, 3
        %s463 = scalar_select %p462, %s461, 3
        %s464 = smul.addr %s463, 2
        %s465 = smul.addr %s464, 8
        %s466 = scalar_lea.vmem %s0, %s465
        %s467 = smul.u32 2, %s28
        %p468 = scmp.lt.s32.totalorder %s29, 3
        %s469 = scalar_select %p468, %s29, 3
        %s470 = smul.addr %s469, 16
        %s471 = smul.addr %s470, 4
        %s472 = scalar_lea.vmem %s1, %s471
        %p473 = scmp.lt.s32.totalorder %s29, 3
        %s474 = scalar_select %p473, %s29, 3
        %s475 = smul.addr %s474, 16
        %s476 = smul.addr %s475, 4
        %s477 = scalar_lea.vmem %s2, %s476
        %p478 = scmp.lt.s32.totalorder %s29, 3
        %s479 = scalar_select %p478, %s29, 3
        %s480 = smul.addr %s479, 16
        %s481 = smul.addr %s480, 4
        %s482 = scalar_lea.vmem %s3, %s481
        %p483 = scmp.lt.s32.totalorder %s29, 3
        %s484 = scalar_select %p483, %s29, 3
        %s485 = scalar_lea.vmem %s4, %s484
        %p486 = scmp.lt.s32.totalorder %s29, 3
        %s487 = scalar_select %p486, %s29, 3
        %s488 = scalar_lea.vmem %s5, %s487
        %p489 = scmp.lt.s32.totalorder %s29, 3
        %s490 = scalar_select %p489, %s29, 3
        %s491 = scalar_lea.vmem %s6, %s490
        %p492 = scmp.lt.s32.totalorder %s29, 3
        %s493 = scalar_select %p492, %s29, 3
        %s494 = smul.addr %s493, 4
        %s495 = smul.addr %s494, 4
        %s496 = scalar_lea.vmem %s7, %s495
        %s497 = smul.u32 2, %s28
        %p499 = scmp.eq.s32.totalorder %s29, 0
        // Predicated region
        $region61: #{tpu_custom_call.1} parent=59 // pred_check
          %p500 = pneg %p499
        $region62: #{tpu_custom_call.1} parent=59 // pred_check_branch
          %502 = sbr.rel (%p500) target = $region64
        $region63: #{tpu_custom_call.1} parent=59 // pred_region
          %503 = vst [vmem:[#allocation2] sm:$0xff] 0.0
          %504 = vst [vmem:[#allocation2 + $0x8] sm:$0xff] 0.0
          %505 = vst [vmem:[#allocation2 + $0x10] sm:$0xff] 0.0
          %506 = vst [vmem:[#allocation2 + $0x18] sm:$0xff] 0.0
        $region64: #{tpu_custom_call.1} parent=59 // pred_fallthru
          _
        %v507 = vld [vmem:[%s466] sm:$0xff]
        %v508 = vld [vmem:[%s466 + $0x8] sm:$0xff]
        %v509 = vld [vmem:[%s466 + $0x10] sm:$0xff]
        %v510 = vld [vmem:[%s466 + $0x18] sm:$0xff]
        %v511 = vpack.c.bf16 %v508, %v507
        %v512 = vpack.c.bf16 %v510, %v509
        %v513 = vld [vmem:[%s472] sm:$0xf]
        %v514 = vld [vmem:[%s472 + $0x4] sm:$0xf]
        %v515 = vld [vmem:[%s472 + $0x8] sm:$0xf]
        %v516 = vld [vmem:[%s472 + $0xc] sm:$0xf]
        %v517 = vld [vmem:[%s472 + $0x10] sm:$0xf]
        %v518 = vld [vmem:[%s472 + $0x14] sm:$0xf]
        %v519 = vld [vmem:[%s472 + $0x18] sm:$0xf]
        %v520 = vld [vmem:[%s472 + $0x1c] sm:$0xf]
        %v521 = vld [vmem:[%s472 + $0x20] sm:$0xf]
        %v522 = vld [vmem:[%s472 + $0x24] sm:$0xf]
        %v523 = vld [vmem:[%s472 + $0x28] sm:$0xf]
        %v524 = vld [vmem:[%s472 + $0x2c] sm:$0xf]
        %v525 = vld [vmem:[%s472 + $0x30] sm:$0xf]
        %v526 = vld [vmem:[%s472 + $0x34] sm:$0xf]
        %v527 = vld [vmem:[%s472 + $0x38] sm:$0xf]
        %v528 = vld [vmem:[%s472 + $0x3c] sm:$0xf]
        %v529 = vld [vmem:[%s485] sm:$0x1]
        %v531 = vlaneseq
        %v532 = vshrl.u32 %v531, 7
        %v533 = vsub.s32 0, %v532
        %v534 = vrot.slane %v529, %v533
        %v552 = vunpack.c.l.b16 %v513
        %v553 = vunpack.c.l.b16 %v514
        %v554 = vunpack.c.l.b16 %v515
        %v555 = vunpack.c.l.b16 %v516
        %v556 = vunpack.c.l.b16 %v517
        %v557 = vunpack.c.l.b16 %v518
        %v558 = vunpack.c.l.b16 %v519
        %v559 = vunpack.c.l.b16 %v520
        %v560 = vunpack.c.l.b16 %v521
        %v561 = vunpack.c.l.b16 %v522
        %v562 = vunpack.c.l.b16 %v523
        %v563 = vunpack.c.l.b16 %v524
        %v564 = vunpack.c.l.b16 %v525
        %v565 = vunpack.c.l.b16 %v526
        %v566 = vunpack.c.l.b16 %v527
        %v567 = vunpack.c.l.b16 %v528
        %v568 = vpack.c.b16 %v553, %v552
        %v569 = vpack.c.b16 %v555, %v554
        %v570 = vpack.c.b16 %v557, %v556
        %v571 = vpack.c.b16 %v559, %v558
        %v572 = vpack.c.b16 %v561, %v560
        %v573 = vpack.c.b16 %v563, %v562
        %v574 = vpack.c.b16 %v565, %v564
        %v575 = vpack.c.b16 %v567, %v566
        %584 = vmatprep.subr.bf16.mxu0 0
        %585 = vmatpush1.bf16.msra.mxu0 %v575
        %586 = vmatprep.subr.bf16.mxu0 0
        %587 = vmatpush1.bf16.msra.mxu0 %v574
        %588 = vmatprep.subr.bf16.mxu0 0
        %589 = vmatpush1.bf16.msra.mxu0 %v573
        %590 = vmatprep.subr.bf16.mxu0 0
        %591 = vmatpush1.bf16.msra.mxu0 %v572
        %592 = vmatprep.subr.bf16.mxu0 0
        %593 = vmatpush1.bf16.msra.mxu0 %v571
        %594 = vmatprep.subr.bf16.mxu0 0
        %595 = vmatpush1.bf16.msra.mxu0 %v570
        %596 = vmatprep.subr.bf16.mxu0 0
        %597 = vmatpush1.bf16.msra.mxu0 %v569
        %598 = vmatprep.subr.bf16.mxu0 0
        %599 = vmatpush1.bf16.msra.mxu0 %v568
        %600 = vmatprep.subr.bf16.mxu0 0
        %601 = vmatpush2.bf16.msra.mxu0 0
        %602 = vmatprep.subr.bf16.mxu0 0
        %603 = vmatpush2.bf16.msra.mxu0 0
        %604 = vmatprep.subr.bf16.mxu0 0
        %605 = vmatpush2.bf16.msra.mxu0 0
        %606 = vmatprep.subr.bf16.mxu0 0
        %607 = vmatpush2.bf16.msra.mxu0 0
        %608 = vmatprep.subr.bf16.mxu0 0
        %609 = vmatpush2.bf16.msra.mxu0 0
        %610 = vmatprep.subr.bf16.mxu0 0
        %611 = vmatpush2.bf16.msra.mxu0 0
        %612 = vmatprep.subr.bf16.mxu0 0
        %613 = vmatpush2.bf16.msra.mxu0 0
        %614 = vmatprep.subr.bf16.mxu0 0
        %615 = vmatpush2.bf16.msra.mxu0 0
        %616 = vmatprep.mubr.bf16.mxu0 0
        %617 = vmatmul.mubr.bf16.gmra.mxu0 %v511
        %v618 = vpop.f32.mrf.mxu0
        %v619 = vadd.f32 %v534, %v618
        %v620 = vpop.f32.mrf.mxu0
        %v621 = vpop.f32.mrf.mxu0
        %v622 = vadd.f32 %v534, %v621
        %v623 = vpop.f32.mrf.mxu0
        %624 = vmatprep.mubr.bf16.mxu0 0
        %625 = vmatmul.mubr.bf16.gmra.mxu0 %v512
        %v626 = vpop.f32.mrf.mxu0
        %v627 = vadd.f32 %v534, %v626
        %v628 = vpop.f32.mrf.mxu0
        %v629 = vpop.f32.mrf.mxu0
        %v630 = vadd.f32 %v534, %v629
        %v631 = vpop.f32.mrf.mxu0
        %632 = vdwg.mxu0
        %v633 = vld [vmem:[%s477] sm:$0xf]
        %v634 = vld [vmem:[%s477 + $0x4] sm:$0xf]
        %v635 = vld [vmem:[%s477 + $0x8] sm:$0xf]
        %v636 = vld [vmem:[%s477 + $0xc] sm:$0xf]
        %v637 = vld [vmem:[%s477 + $0x10] sm:$0xf]
        %v638 = vld [vmem:[%s477 + $0x14] sm:$0xf]
        %v639 = vld [vmem:[%s477 + $0x18] sm:$0xf]
        %v640 = vld [vmem:[%s477 + $0x1c] sm:$0xf]
        %v641 = vld [vmem:[%s477 + $0x20] sm:$0xf]
        %v642 = vld [vmem:[%s477 + $0x24] sm:$0xf]
        %v643 = vld [vmem:[%s477 + $0x28] sm:$0xf]
        %v644 = vld [vmem:[%s477 + $0x2c] sm:$0xf]
        %v645 = vld [vmem:[%s477 + $0x30] sm:$0xf]
        %v646 = vld [vmem:[%s477 + $0x34] sm:$0xf]
        %v647 = vld [vmem:[%s477 + $0x38] sm:$0xf]
        %v648 = vld [vmem:[%s477 + $0x3c] sm:$0xf]
        %v649 = vld [vmem:[%s488] sm:$0x1]
        %v651 = vlaneseq
        %v652 = vshrl.u32 %v651, 7
        %v653 = vsub.s32 0, %v652
        %v654 = vrot.slane %v649, %v653
        %v672 = vunpack.c.l.b16 %v633
        %v673 = vunpack.c.l.b16 %v634
        %v674 = vunpack.c.l.b16 %v635
        %v675 = vunpack.c.l.b16 %v636
        %v676 = vunpack.c.l.b16 %v637
        %v677 = vunpack.c.l.b16 %v638
        %v678 = vunpack.c.l.b16 %v639
        %v679 = vunpack.c.l.b16 %v640
        %v680 = vunpack.c.l.b16 %v641
        %v681 = vunpack.c.l.b16 %v642
        %v682 = vunpack.c.l.b16 %v643
        %v683 = vunpack.c.l.b16 %v644
        %v684 = vunpack.c.l.b16 %v645
        %v685 = vunpack.c.l.b16 %v646
        %v686 = vunpack.c.l.b16 %v647
        %v687 = vunpack.c.l.b16 %v648
        %v688 = vpack.c.b16 %v673, %v672
        %v689 = vpack.c.b16 %v675, %v674
        %v690 = vpack.c.b16 %v677, %v676
        %v691 = vpack.c.b16 %v679, %v678
        %v692 = vpack.c.b16 %v681, %v680
        %v693 = vpack.c.b16 %v683, %v682
        %v694 = vpack.c.b16 %v685, %v684
        %v695 = vpack.c.b16 %v687, %v686
        %704 = vmatprep.subr.bf16.mxu0 0
        %705 = vmatpush1.bf16.msra.mxu0 %v695
        %706 = vmatprep.subr.bf16.mxu0 0
        %707 = vmatpush1.bf16.msra.mxu0 %v694
        %708 = vmatprep.subr.bf16.mxu0 0
        %709 = vmatpush1.bf16.msra.mxu0 %v693
        %710 = vmatprep.subr.bf16.mxu0 0
        %711 = vmatpush1.bf16.msra.mxu0 %v692
        %712 = vmatprep.subr.bf16.mxu0 0
        %713 = vmatpush1.bf16.msra.mxu0 %v691
        %714 = vmatprep.subr.bf16.mxu0 0
        %715 = vmatpush1.bf16.msra.mxu0 %v690
        %716 = vmatprep.subr.bf16.mxu0 0
        %717 = vmatpush1.bf16.msra.mxu0 %v689
        %718 = vmatprep.subr.bf16.mxu0 0
        %719 = vmatpush1.bf16.msra.mxu0 %v688
        %720 = vmatprep.subr.bf16.mxu0 0
        %721 = vmatpush2.bf16.msra.mxu0 0
        %722 = vmatprep.subr.bf16.mxu0 0
        %723 = vmatpush2.bf16.msra.mxu0 0
        %724 = vmatprep.subr.bf16.mxu0 0
        %725 = vmatpush2.bf16.msra.mxu0 0
        %726 = vmatprep.subr.bf16.mxu0 0
        %727 = vmatpush2.bf16.msra.mxu0 0
        %728 = vmatprep.subr.bf16.mxu0 0
        %729 = vmatpush2.bf16.msra.mxu0 0
        %730 = vmatprep.subr.bf16.mxu0 0
        %731 = vmatpush2.bf16.msra.mxu0 0
        %732 = vmatprep.subr.bf16.mxu0 0
        %733 = vmatpush2.bf16.msra.mxu0 0
        %734 = vmatprep.subr.bf16.mxu0 0
        %735 = vmatpush2.bf16.msra.mxu0 0
        %736 = vmatprep.mubr.bf16.mxu0 0
        %737 = vmatmul.mubr.bf16.gmra.mxu0 %v511
        %v738 = vpop.f32.mrf.mxu0
        %v739 = vadd.f32 %v654, %v738
        %v740 = vpop.f32.mrf.mxu0
        %v741 = vpop.f32.mrf.mxu0
        %v742 = vadd.f32 %v654, %v741
        %v743 = vpop.f32.mrf.mxu0
        %744 = vmatprep.mubr.bf16.mxu0 0
        %745 = vmatmul.mubr.bf16.gmra.mxu0 %v512
        %v746 = vpop.f32.mrf.mxu0
        %v747 = vadd.f32 %v654, %v746
        %v748 = vpop.f32.mrf.mxu0
        %v749 = vpop.f32.mrf.mxu0
        %v750 = vadd.f32 %v654, %v749
        %v751 = vpop.f32.mrf.mxu0
        %752 = vdwg.mxu0
        %v753 = vld [vmem:[%s482] sm:$0xf]
        %v754 = vld [vmem:[%s482 + $0x4] sm:$0xf]
        %v755 = vld [vmem:[%s482 + $0x8] sm:$0xf]
        %v756 = vld [vmem:[%s482 + $0xc] sm:$0xf]
        %v757 = vld [vmem:[%s482 + $0x10] sm:$0xf]
        %v758 = vld [vmem:[%s482 + $0x14] sm:$0xf]
        %v759 = vld [vmem:[%s482 + $0x18] sm:$0xf]
        %v760 = vld [vmem:[%s482 + $0x1c] sm:$0xf]
        %v761 = vld [vmem:[%s482 + $0x20] sm:$0xf]
        %v762 = vld [vmem:[%s482 + $0x24] sm:$0xf]
        %v763 = vld [vmem:[%s482 + $0x28] sm:$0xf]
        %v764 = vld [vmem:[%s482 + $0x2c] sm:$0xf]
        %v765 = vld [vmem:[%s482 + $0x30] sm:$0xf]
        %v766 = vld [vmem:[%s482 + $0x34] sm:$0xf]
        %v767 = vld [vmem:[%s482 + $0x38] sm:$0xf]
        %v768 = vld [vmem:[%s482 + $0x3c] sm:$0xf]
        %v769 = vld [vmem:[%s491] sm:$0x1]
        %v771 = vlaneseq
        %v772 = vshrl.u32 %v771, 7
        %v773 = vsub.s32 0, %v772
        %v774 = vrot.slane %v769, %v773
        %v792 = vunpack.c.l.b16 %v753
        %v793 = vunpack.c.l.b16 %v754
        %v794 = vunpack.c.l.b16 %v755
        %v795 = vunpack.c.l.b16 %v756
        %v796 = vunpack.c.l.b16 %v757
        %v797 = vunpack.c.l.b16 %v758
        %v798 = vunpack.c.l.b16 %v759
        %v799 = vunpack.c.l.b16 %v760
        %v800 = vunpack.c.l.b16 %v761
        %v801 = vunpack.c.l.b16 %v762
        %v802 = vunpack.c.l.b16 %v763
        %v803 = vunpack.c.l.b16 %v764
        %v804 = vunpack.c.l.b16 %v765
        %v805 = vunpack.c.l.b16 %v766
        %v806 = vunpack.c.l.b16 %v767
        %v807 = vunpack.c.l.b16 %v768
        %v808 = vpack.c.b16 %v793, %v792
        %v809 = vpack.c.b16 %v795, %v794
        %v810 = vpack.c.b16 %v797, %v796
        %v811 = vpack.c.b16 %v799, %v798
        %v812 = vpack.c.b16 %v801, %v800
        %v813 = vpack.c.b16 %v803, %v802
        %v814 = vpack.c.b16 %v805, %v804
        %v815 = vpack.c.b16 %v807, %v806
        %824 = vmatprep.subr.bf16.mxu0 0
        %825 = vmatpush1.bf16.msra.mxu0 %v815
        %826 = vmatprep.subr.bf16.mxu0 0
        %827 = vmatpush1.bf16.msra.mxu0 %v814
        %828 = vmatprep.subr.bf16.mxu0 0
        %829 = vmatpush1.bf16.msra.mxu0 %v813
        %830 = vmatprep.subr.bf16.mxu0 0
        %831 = vmatpush1.bf16.msra.mxu0 %v812
        %832 = vmatprep.subr.bf16.mxu0 0
        %833 = vmatpush1.bf16.msra.mxu0 %v811
        %834 = vmatprep.subr.bf16.mxu0 0
        %835 = vmatpush1.bf16.msra.mxu0 %v810
        %836 = vmatprep.subr.bf16.mxu0 0
        %837 = vmatpush1.bf16.msra.mxu0 %v809
        %838 = vmatprep.subr.bf16.mxu0 0
        %839 = vmatpush1.bf16.msra.mxu0 %v808
        %840 = vmatprep.subr.bf16.mxu0 0
        %841 = vmatpush2.bf16.msra.mxu0 0
        %842 = vmatprep.subr.bf16.mxu0 0
        %843 = vmatpush2.bf16.msra.mxu0 0
        %844 = vmatprep.subr.bf16.mxu0 0
        %845 = vmatpush2.bf16.msra.mxu0 0
        %846 = vmatprep.subr.bf16.mxu0 0
        %847 = vmatpush2.bf16.msra.mxu0 0
        %848 = vmatprep.subr.bf16.mxu0 0
        %849 = vmatpush2.bf16.msra.mxu0 0
        %850 = vmatprep.subr.bf16.mxu0 0
        %851 = vmatpush2.bf16.msra.mxu0 0
        %852 = vmatprep.subr.bf16.mxu0 0
        %853 = vmatpush2.bf16.msra.mxu0 0
        %854 = vmatprep.subr.bf16.mxu0 0
        %855 = vmatpush2.bf16.msra.mxu0 0
        %856 = vmatprep.mubr.bf16.mxu0 0
        %857 = vmatmul.mubr.bf16.gmra.mxu0 %v511
        %v858 = vpop.f32.mrf.mxu0
        %v859 = vadd.f32 %v774, %v858
        %v860 = vpop.f32.mrf.mxu0
        %v861 = vpop.f32.mrf.mxu0
        %v862 = vadd.f32 %v774, %v861
        %v863 = vpop.f32.mrf.mxu0
        %864 = vmatprep.mubr.bf16.mxu0 0
        %865 = vmatmul.mubr.bf16.gmra.mxu0 %v512
        %v866 = vpop.f32.mrf.mxu0
        %v867 = vadd.f32 %v774, %v866
        %v868 = vpop.f32.mrf.mxu0
        %v869 = vpop.f32.mrf.mxu0
        %v870 = vadd.f32 %v774, %v869
        %v871 = vpop.f32.mrf.mxu0
        %872 = vdwg.mxu0
        %v873 = vpack.c.bf16 %v622, %v619
        %v874 = vpack.c.bf16 %v630, %v627
        %v875 = vpack.c.bf16 %v742, %v739
        %v876 = vpack.c.bf16 %v750, %v747
        %v877 = vpack.c.bf16 %v862, %v859
        %v878 = vpack.c.bf16 %v870, %v867
        %vm879 = vcmask 261120
        %v881 = vsel %vm879, %v873, 0
        %v884 = vsel %vm879, %v875, 0
        %886 = vmatprep.subr.bf16.mxu0 0
        %887 = vmatpush1.bf16.xpose.msra.mxu0 0
        %888 = vmatprep.subr.bf16.mxu0 0
        %889 = vmatpush1.bf16.xpose.msra.mxu0 0
        %890 = vmatprep.subr.bf16.mxu0 0
        %891 = vmatpush1.bf16.xpose.msra.mxu0 0
        %892 = vmatprep.subr.bf16.mxu0 0
        %893 = vmatpush1.bf16.xpose.msra.mxu0 0
        %894 = vmatprep.subr.bf16.mxu0 0
        %895 = vmatpush1.bf16.xpose.msra.mxu0 0
        %896 = vmatprep.subr.bf16.mxu0 0
        %897 = vmatpush1.bf16.xpose.msra.mxu0 0
        %898 = vmatprep.subr.bf16.mxu0 0
        %899 = vmatpush1.bf16.xpose.msra.mxu0 0
        %900 = vmatprep.subr.bf16.mxu0 0
        %901 = vmatpush1.bf16.xpose.msra.mxu0 %v884
        %902 = vmatprep.subr.bf16.mxu0 0
        %903 = vmatpush2.bf16.xpose.msra.mxu0 0
        %904 = vmatprep.subr.bf16.mxu0 0
        %905 = vmatpush2.bf16.xpose.msra.mxu0 0
        %906 = vmatprep.subr.bf16.mxu0 0
        %907 = vmatpush2.bf16.xpose.msra.mxu0 0
        %908 = vmatprep.subr.bf16.mxu0 0
        %909 = vmatpush2.bf16.xpose.msra.mxu0 0
        %910 = vmatprep.subr.bf16.mxu0 0
        %911 = vmatpush2.bf16.xpose.msra.mxu0 0
        %912 = vmatprep.subr.bf16.mxu0 0
        %913 = vmatpush2.bf16.xpose.msra.mxu0 0
        %914 = vmatprep.subr.bf16.mxu0 0
        %915 = vmatpush2.bf16.xpose.msra.mxu0 0
        %916 = vmatprep.subr.bf16.mxu0 0
        %917 = vmatpush2.bf16.xpose.msra.mxu0 0
        %918 = vmatprep.mubr.bf16.mxu0 0
        %919 = vmatmul.mubr.bf16.gmra.mxu0 %v881
        %v920 = vpop.f32.mrf.mxu0
        %v921 = vadd.f32 0.0, %v920
        %v922 = vpop.f32.mrf.mxu0
        %v923 = vpop.f32.mrf.mxu0
        %v924 = vadd.f32 0.0, %v923
        %v925 = vpop.f32.mrf.mxu0
        %926 = vdwg.mxu0
        %v928 = vsel %vm879, %v874, 0
        %v931 = vsel %vm879, %v876, 0
        %933 = vmatprep.subr.bf16.mxu0 0
        %934 = vmatpush1.bf16.xpose.msra.mxu0 0
        %935 = vmatprep.subr.bf16.mxu0 0
        %936 = vmatpush1.bf16.xpose.msra.mxu0 0
        %937 = vmatprep.subr.bf16.mxu0 0
        %938 = vmatpush1.bf16.xpose.msra.mxu0 0
        %939 = vmatprep.subr.bf16.mxu0 0
        %940 = vmatpush1.bf16.xpose.msra.mxu0 0
        %941 = vmatprep.subr.bf16.mxu0 0
        %942 = vmatpush1.bf16.xpose.msra.mxu0 0
        %943 = vmatprep.subr.bf16.mxu0 0
        %944 = vmatpush1.bf16.xpose.msra.mxu0 0
        %945 = vmatprep.subr.bf16.mxu0 0
        %946 = vmatpush1.bf16.xpose.msra.mxu0 0
        %947 = vmatprep.subr.bf16.mxu0 0
        %948 = vmatpush1.bf16.xpose.msra.mxu0 %v931
        %949 = vmatprep.subr.bf16.mxu0 0
        %950 = vmatpush2.bf16.xpose.msra.mxu0 0
        %951 = vmatprep.subr.bf16.mxu0 0
        %952 = vmatpush2.bf16.xpose.msra.mxu0 0
        %953 = vmatprep.subr.bf16.mxu0 0
        %954 = vmatpush2.bf16.xpose.msra.mxu0 0
        %955 = vmatprep.subr.bf16.mxu0 0
        %956 = vmatpush2.bf16.xpose.msra.mxu0 0
        %957 = vmatprep.subr.bf16.mxu0 0
        %958 = vmatpush2.bf16.xpose.msra.mxu0 0
        %959 = vmatprep.subr.bf16.mxu0 0
        %960 = vmatpush2.bf16.xpose.msra.mxu0 0
        %961 = vmatprep.subr.bf16.mxu0 0
        %962 = vmatpush2.bf16.xpose.msra.mxu0 0
        %963 = vmatprep.subr.bf16.mxu0 0
        %964 = vmatpush2.bf16.xpose.msra.mxu0 0
        %965 = vmatprep.mubr.bf16.mxu0 0
        %966 = vmatmul.mubr.bf16.gmra.mxu0 %v928
        %v967 = vpop.f32.mrf.mxu0
        %v968 = vadd.f32 0.0, %v967
        %v969 = vpop.f32.mrf.mxu0
        %v970 = vpop.f32.mrf.mxu0
        %v971 = vadd.f32 0.0, %v970
        %v972 = vpop.f32.mrf.mxu0
        %973 = vdwg.mxu0
        %vm974 = vcmask 130048
        %v975 = vsel %vm974, %v921, -inf
        %976 = vmax.xlane.f32.xlu0 %v975
        %v977 = vpop.xlane.xlu0 %976
        %v978 = vsel %vm974, %v924, -inf
        %979 = vmax.xlane.f32.xlu0 %v978
        %v980 = vpop.xlane.xlu0 %979
        %v981 = vsel %vm974, %v968, -inf
        %982 = vmax.xlane.f32.xlu0 %v981
        %v983 = vpop.xlane.xlu0 %982
        %v984 = vsel %vm974, %v971, -inf
        %985 = vmax.xlane.f32.xlu0 %v984
        %v986 = vpop.xlane.xlu0 %985
        %v987 = vsub.f32 %v921, %v977
        %v988 = vsub.f32 %v924, %v980
        %v989 = vsub.f32 %v968, %v983
        %v990 = vsub.f32 %v971, %v986
        %v991 = vmul.f32 %v987, 1.442695
        %v992 = vpow.pop %v991
        %v993 = vmul.f32 %v988, 1.442695
        %v994 = vpow.pop %v993
        %v995 = vmul.f32 %v989, 1.442695
        %v996 = vpow.pop %v995
        %v997 = vmul.f32 %v990, 1.442695
        %v998 = vpow.pop %v997
        %v999 = vsel %vm974, %v992, 0.0
        %1000 = vadd.xlane.f32.xlu0 %v999
        %v1001 = vpop.xlane.xlu0 %1000
        %v1002 = vsel %vm974, %v994, 0.0
        %1003 = vadd.xlane.f32.xlu0 %v1002
        %v1004 = vpop.xlane.xlu0 %1003
        %v1005 = vsel %vm974, %v996, 0.0
        %1006 = vadd.xlane.f32.xlu0 %v1005
        %v1007 = vpop.xlane.xlu0 %1006
        %v1008 = vsel %vm974, %v998, 0.0
        %1009 = vadd.xlane.f32.xlu0 %v1008
        %v1010 = vpop.xlane.xlu0 %1009
        %v1011 = vrcp.pop %v1001
        %v1012 = vrcp.pop %v1004
        %v1013 = vrcp.pop %v1007
        %v1014 = vrcp.pop %v1010
        %v1015 = vmul.f32 %v992, %v1011
        %v1016 = vmul.f32 %v994, %v1012
        %v1017 = vmul.f32 %v996, %v1013
        %v1018 = vmul.f32 %v998, %v1014
        %v1019 = vpack.c.bf16 %v1016, %v1015
        %v1020 = vpack.c.bf16 %v1018, %v1017
        %v1022 = vsel %vm974, %v1019, 0
        %1024 = vmatprep.subr.bf16.mxu0 0
        %1025 = vmatpush1.bf16.msra.mxu0 0
        %1026 = vmatprep.subr.bf16.mxu0 0
        %1027 = vmatpush1.bf16.msra.mxu0 0
        %1028 = vmatprep.subr.bf16.mxu0 0
        %1029 = vmatpush1.bf16.msra.mxu0 0
        %1030 = vmatprep.subr.bf16.mxu0 0
        %1031 = vmatpush1.bf16.msra.mxu0 0
        %1032 = vmatprep.subr.bf16.mxu0 0
        %1033 = vmatpush1.bf16.msra.mxu0 0
        %1034 = vmatprep.subr.bf16.mxu0 0
        %1035 = vmatpush1.bf16.msra.mxu0 0
        %1036 = vmatprep.subr.bf16.mxu0 0
        %1037 = vmatpush1.bf16.msra.mxu0 0
        %1038 = vmatprep.subr.bf16.mxu0 0
        %1039 = vmatpush1.bf16.msra.mxu0 %v877
        %1040 = vmatprep.subr.bf16.mxu0 0
        %1041 = vmatpush2.bf16.msra.mxu0 0
        %1042 = vmatprep.subr.bf16.mxu0 0
        %1043 = vmatpush2.bf16.msra.mxu0 0
        %1044 = vmatprep.subr.bf16.mxu0 0
        %1045 = vmatpush2.bf16.msra.mxu0 0
        %1046 = vmatprep.subr.bf16.mxu0 0
        %1047 = vmatpush2.bf16.msra.mxu0 0
        %1048 = vmatprep.subr.bf16.mxu0 0
        %1049 = vmatpush2.bf16.msra.mxu0 0
        %1050 = vmatprep.subr.bf16.mxu0 0
        %1051 = vmatpush2.bf16.msra.mxu0 0
        %1052 = vmatprep.subr.bf16.mxu0 0
        %1053 = vmatpush2.bf16.msra.mxu0 0
        %1054 = vmatprep.subr.bf16.mxu0 0
        %1055 = vmatpush2.bf16.msra.mxu0 0
        %1056 = vmatprep.mubr.bf16.mxu0 0
        %1057 = vmatmul.mubr.bf16.gmra.mxu0 %v1022
        %v1058 = vpop.f32.mrf.mxu0
        %v1059 = vadd.f32 0.0, %v1058
        %v1060 = vpop.f32.mrf.mxu0
        %v1061 = vpop.f32.mrf.mxu0
        %v1062 = vadd.f32 0.0, %v1061
        %v1063 = vpop.f32.mrf.mxu0
        %1064 = vdwg.mxu0
        %v1066 = vsel %vm974, %v1020, 0
        %1068 = vmatprep.subr.bf16.mxu0 0
        %1069 = vmatpush1.bf16.msra.mxu0 0
        %1070 = vmatprep.subr.bf16.mxu0 0
        %1071 = vmatpush1.bf16.msra.mxu0 0
        %1072 = vmatprep.subr.bf16.mxu0 0
        %1073 = vmatpush1.bf16.msra.mxu0 0
        %1074 = vmatprep.subr.bf16.mxu0 0
        %1075 = vmatpush1.bf16.msra.mxu0 0
        %1076 = vmatprep.subr.bf16.mxu0 0
        %1077 = vmatpush1.bf16.msra.mxu0 0
        %1078 = vmatprep.subr.bf16.mxu0 0
        %1079 = vmatpush1.bf16.msra.mxu0 0
        %1080 = vmatprep.subr.bf16.mxu0 0
        %1081 = vmatpush1.bf16.msra.mxu0 0
        %1082 = vmatprep.subr.bf16.mxu0 0
        %1083 = vmatpush1.bf16.msra.mxu0 %v878
        %1084 = vmatprep.subr.bf16.mxu0 0
        %1085 = vmatpush2.bf16.msra.mxu0 0
        %1086 = vmatprep.subr.bf16.mxu0 0
        %1087 = vmatpush2.bf16.msra.mxu0 0
        %1088 = vmatprep.subr.bf16.mxu0 0
        %1089 = vmatpush2.bf16.msra.mxu0 0
        %1090 = vmatprep.subr.bf16.mxu0 0
        %1091 = vmatpush2.bf16.msra.mxu0 0
        %1092 = vmatprep.subr.bf16.mxu0 0
        %1093 = vmatpush2.bf16.msra.mxu0 0
        %1094 = vmatprep.subr.bf16.mxu0 0
        %1095 = vmatpush2.bf16.msra.mxu0 0
        %1096 = vmatprep.subr.bf16.mxu0 0
        %1097 = vmatpush2.bf16.msra.mxu0 0
        %1098 = vmatprep.subr.bf16.mxu0 0
        %1099 = vmatpush2.bf16.msra.mxu0 0
        %1100 = vmatprep.mubr.bf16.mxu0 0
        %1101 = vmatmul.mubr.bf16.gmra.mxu0 %v1066
        %v1102 = vpop.f32.mrf.mxu0
        %v1103 = vadd.f32 0.0, %v1102
        %v1104 = vpop.f32.mrf.mxu0
        %v1105 = vpop.f32.mrf.mxu0
        %v1106 = vadd.f32 0.0, %v1105
        %v1107 = vpop.f32.mrf.mxu0
        %1108 = vdwg.mxu0
        %v1109 = vld [vmem:[#allocation2] sm:$0xff]
        %v1110 = vld [vmem:[#allocation2 + $0x8] sm:$0xff]
        %v1111 = vld [vmem:[#allocation2 + $0x10] sm:$0xff]
        %v1112 = vld [vmem:[#allocation2 + $0x18] sm:$0xff]
        %v1113 = vpack.c.bf16 %v1062, %v1059
        %v1114 = vpack.c.bf16 %v1106, %v1103
        %v1115 = vld [vmem:[%s496] sm:$0xf]
        %v1116 = vld [vmem:[%s496 + $0x4] sm:$0xf]
        %v1117 = vld [vmem:[%s496 + $0x8] sm:$0xf]
        %v1118 = vld [vmem:[%s496 + $0xc] sm:$0xf]
        %v1123 = vunpack.c.l.b16 %v1115
        %v1124 = vunpack.c.l.b16 %v1116
        %v1125 = vunpack.c.l.b16 %v1117
        %v1126 = vunpack.c.l.b16 %v1118
        %v1127 = vpack.c.b16 %v1124, %v1123
        %v1128 = vpack.c.b16 %v1126, %v1125
        %v1132 = vsel %vm879, %v1113, 0
        %v1135 = vsel %vm879, %v1114, 0
        %1137 = vmatprep.subr.bf16.mxu0 0
        %1138 = vmatpush1.bf16.msra.mxu0 0
        %1139 = vmatprep.subr.bf16.mxu0 0
        %1140 = vmatpush1.bf16.msra.mxu0 0
        %1141 = vmatprep.subr.bf16.mxu0 0
        %1142 = vmatpush1.bf16.msra.mxu0 0
        %1143 = vmatprep.subr.bf16.mxu0 0
        %1144 = vmatpush1.bf16.msra.mxu0 0
        %1145 = vmatprep.subr.bf16.mxu0 0
        %1146 = vmatpush1.bf16.msra.mxu0 0
        %1147 = vmatprep.subr.bf16.mxu0 0
        %1148 = vmatpush1.bf16.msra.mxu0 0
        %1149 = vmatprep.subr.bf16.mxu0 0
        %1150 = vmatpush1.bf16.msra.mxu0 %v1128
        %1151 = vmatprep.subr.bf16.mxu0 0
        %1152 = vmatpush1.bf16.msra.mxu0 %v1127
        %1153 = vmatprep.subr.bf16.mxu0 0
        %1154 = vmatpush2.bf16.msra.mxu0 0
        %1155 = vmatprep.subr.bf16.mxu0 0
        %1156 = vmatpush2.bf16.msra.mxu0 0
        %1157 = vmatprep.subr.bf16.mxu0 0
        %1158 = vmatpush2.bf16.msra.mxu0 0
        %1159 = vmatprep.subr.bf16.mxu0 0
        %1160 = vmatpush2.bf16.msra.mxu0 0
        %1161 = vmatprep.subr.bf16.mxu0 0
        %1162 = vmatpush2.bf16.msra.mxu0 0
        %1163 = vmatprep.subr.bf16.mxu0 0
        %1164 = vmatpush2.bf16.msra.mxu0 0
        %1165 = vmatprep.subr.bf16.mxu0 0
        %1166 = vmatpush2.bf16.msra.mxu0 0
        %1167 = vmatprep.subr.bf16.mxu0 0
        %1168 = vmatpush2.bf16.msra.mxu0 0
        %1169 = vmatprep.mubr.bf16.mxu0 0
        %1170 = vmatmul.mubr.bf16.gmra.mxu0 %v1132
        %v1171 = vpop.f32.mrf.mxu0
        %v1172 = vadd.f32 0.0, %v1171
        %v1173 = vpop.f32.mrf.mxu0
        %v1174 = vpop.f32.mrf.mxu0
        %v1175 = vadd.f32 0.0, %v1174
        %v1176 = vpop.f32.mrf.mxu0
        %1177 = vmatprep.mubr.bf16.mxu0 0
        %1178 = vmatmul.mubr.bf16.gmra.mxu0 %v1135
        %v1179 = vpop.f32.mrf.mxu0
        %v1180 = vadd.f32 0.0, %v1179
        %v1181 = vpop.f32.mrf.mxu0
        %v1182 = vpop.f32.mrf.mxu0
        %v1183 = vadd.f32 0.0, %v1182
        %v1184 = vpop.f32.mrf.mxu0
        %1185 = vdwg.mxu0
        %v1186 = vadd.f32 %v1109, %v1172
        %v1187 = vadd.f32 %v1110, %v1175
        %v1188 = vadd.f32 %v1111, %v1180
        %v1189 = vadd.f32 %v1112, %v1183
        %1190 = vst [vmem:[#allocation2] sm:$0xff] %v1186
        %1191 = vst [vmem:[#allocation2 + $0x8] sm:$0xff] %v1187
        %1192 = vst [vmem:[#allocation2 + $0x10] sm:$0xff] %v1188
        %1193 = vst [vmem:[#allocation2 + $0x18] sm:$0xff] %v1189
        %p1194 = scmp.eq.s32.totalorder %s29, 3
        // Predicated region
        $region65: #{tpu_custom_call.1} parent=59 // pred_check
          %p1195 = pneg %p1194
        $region66: #{tpu_custom_call.1} parent=59 // pred_check_branch
          %1197 = sbr.rel (%p1195) target = $region68
        $region67: #{tpu_custom_call.1} parent=59 // pred_region
          %v1198 = vld [vmem:[#allocation2] sm:$0xff]
          %v1199 = vld [vmem:[#allocation2 + $0x8] sm:$0xff]
          %v1200 = vld [vmem:[#allocation2 + $0x10] sm:$0xff]
          %v1201 = vld [vmem:[#allocation2 + $0x18] sm:$0xff]
          %v1202 = vld [vmem:[%s8] sm:$0x1]
          %v1204 = vlaneseq
          %v1205 = vshrl.u32 %v1204, 7
          %v1206 = vsub.s32 0, %v1205
          %v1207 = vrot.slane %v1202, %v1206
          %v1209 = vadd.f32 %v1198, %v1207
          %v1210 = vadd.f32 %v1199, %v1207
          %v1211 = vadd.f32 %v1200, %v1207
          %v1212 = vadd.f32 %v1201, %v1207
          %v1213 = vadd.f32 %v1209, %v507
          %v1214 = vadd.f32 %v1210, %v508
          %v1215 = vadd.f32 %v1211, %v509
          %v1216 = vadd.f32 %v1212, %v510
          %v1217 = vpack.c.bf16 %v1214, %v1213
          %v1218 = vpack.c.bf16 %v1216, %v1215
          %v1219 = vld [vmem:[%s9] sm:$0xf]
          %v1220 = vld [vmem:[%s9 + $0x4] sm:$0xf]
          %v1221 = vld [vmem:[%s9 + $0x8] sm:$0xf]
          %v1222 = vld [vmem:[%s9 + $0xc] sm:$0xf]
          %v1223 = vld [vmem:[%s9 + $0x10] sm:$0xf]
          %v1224 = vld [vmem:[%s9 + $0x14] sm:$0xf]
          %v1225 = vld [vmem:[%s9 + $0x18] sm:$0xf]
          %v1226 = vld [vmem:[%s9 + $0x1c] sm:$0xf]
          %v1227 = vld [vmem:[%s9 + $0x20] sm:$0xf]
          %v1228 = vld [vmem:[%s9 + $0x24] sm:$0xf]
          %v1229 = vld [vmem:[%s9 + $0x28] sm:$0xf]
          %v1230 = vld [vmem:[%s9 + $0x2c] sm:$0xf]
          %v1231 = vld [vmem:[%s9 + $0x30] sm:$0xf]
          %v1232 = vld [vmem:[%s9 + $0x34] sm:$0xf]
          %v1233 = vld [vmem:[%s9 + $0x38] sm:$0xf]
          %v1234 = vld [vmem:[%s9 + $0x3c] sm:$0xf]
          %v1251 = vunpack.c.l.b16 %v1219
          %v1252 = vunpack.c.l.b16 %v1220
          %v1253 = vunpack.c.l.b16 %v1221
          %v1254 = vunpack.c.l.b16 %v1222
          %v1255 = vunpack.c.l.b16 %v1223
          %v1256 = vunpack.c.l.b16 %v1224
          %v1257 = vunpack.c.l.b16 %v1225
          %v1258 = vunpack.c.l.b16 %v1226
          %v1259 = vunpack.c.l.b16 %v1227
          %v1260 = vunpack.c.l.b16 %v1228
          %v1261 = vunpack.c.l.b16 %v1229
          %v1262 = vunpack.c.l.b16 %v1230
          %v1263 = vunpack.c.l.b16 %v1231
          %v1264 = vunpack.c.l.b16 %v1232
          %v1265 = vunpack.c.l.b16 %v1233
          %v1266 = vunpack.c.l.b16 %v1234
          %v1267 = vpack.c.b16 %v1252, %v1251
          %v1268 = vpack.c.b16 %v1254, %v1253
          %v1269 = vpack.c.b16 %v1256, %v1255
          %v1270 = vpack.c.b16 %v1258, %v1257
          %v1271 = vpack.c.b16 %v1260, %v1259
          %v1272 = vpack.c.b16 %v1262, %v1261
          %v1273 = vpack.c.b16 %v1264, %v1263
          %v1274 = vpack.c.b16 %v1266, %v1265
          %1283 = vmatprep.subr.bf16.mxu0 0
          %1284 = vmatpush1.bf16.msra.mxu0 %v1274
          %1285 = vmatprep.subr.bf16.mxu0 0
          %1286 = vmatpush1.bf16.msra.mxu0 %v1273
          %1287 = vmatprep.subr.bf16.mxu0 0
          %1288 = vmatpush1.bf16.msra.mxu0 %v1272
          %1289 = vmatprep.subr.bf16.mxu0 0
          %1290 = vmatpush1.bf16.msra.mxu0 %v1271
          %1291 = vmatprep.subr.bf16.mxu0 0
          %1292 = vmatpush1.bf16.msra.mxu0 %v1270
          %1293 = vmatprep.subr.bf16.mxu0 0
          %1294 = vmatpush1.bf16.msra.mxu0 %v1269
          %1295 = vmatprep.subr.bf16.mxu0 0
          %1296 = vmatpush1.bf16.msra.mxu0 %v1268
          %1297 = vmatprep.subr.bf16.mxu0 0
          %1298 = vmatpush1.bf16.msra.mxu0 %v1267
          %1299 = vmatprep.subr.bf16.mxu0 0
          %1300 = vmatpush2.bf16.msra.mxu0 0
          %1301 = vmatprep.subr.bf16.mxu0 0
          %1302 = vmatpush2.bf16.msra.mxu0 0
          %1303 = vmatprep.subr.bf16.mxu0 0
          %1304 = vmatpush2.bf16.msra.mxu0 0
          %1305 = vmatprep.subr.bf16.mxu0 0
          %1306 = vmatpush2.bf16.msra.mxu0 0
          %1307 = vmatprep.subr.bf16.mxu0 0
          %1308 = vmatpush2.bf16.msra.mxu0 0
          %1309 = vmatprep.subr.bf16.mxu0 0
          %1310 = vmatpush2.bf16.msra.mxu0 0
          %1311 = vmatprep.subr.bf16.mxu0 0
          %1312 = vmatpush2.bf16.msra.mxu0 0
          %1313 = vmatprep.subr.bf16.mxu0 0
          %1314 = vmatpush2.bf16.msra.mxu0 0
          %1315 = vmatprep.mubr.bf16.mxu0 0
          %1316 = vmatmul.mubr.bf16.gmra.mxu0 %v1217
          %v1317 = vpop.f32.mrf.mxu0
          %v1318 = vadd.f32 %v1213, %v1317
          %v1319 = vpop.f32.mrf.mxu0
          %v1320 = vpop.f32.mrf.mxu0
          %v1321 = vadd.f32 %v1214, %v1320
          %v1322 = vpop.f32.mrf.mxu0
          %1323 = vmatprep.mubr.bf16.mxu0 0
          %1324 = vmatmul.mubr.bf16.gmra.mxu0 %v1218
          %v1325 = vpop.f32.mrf.mxu0
          %v1326 = vadd.f32 %v1215, %v1325
          %v1327 = vpop.f32.mrf.mxu0
          %v1328 = vpop.f32.mrf.mxu0
          %v1329 = vadd.f32 %v1216, %v1328
          %v1330 = vpop.f32.mrf.mxu0
          %1331 = vdwg.mxu0
          %1332 = vst [vmem:[%s460] sm:$0xff] %v1318
          %1333 = vst [vmem:[%s460 + $0x8] sm:$0xff] %v1321
          %1334 = vst [vmem:[%s460 + $0x10] sm:$0xff] %v1326
          %1335 = vst [vmem:[%s460 + $0x18] sm:$0xff] %v1329
        $region68: #{tpu_custom_call.1} parent=59 // pred_fallthru
          _
        %s1336 = sand.u32 %s294, 1
        %s1337 = scalar_lea.sflag [#allocation4], %s1336
        %s1338 = sand.u32 %s294, 1
        %s1339 = smul.addr %s1338, 32
        %s1340 = scalar_lea.vmem [#allocation3], %s1339
        // Predicated region
        $region69: #{tpu_custom_call.1} parent=59 // pred_check
          %p1341 = pneg %p304
        $region70: #{tpu_custom_call.1} parent=59 // pred_check_branch
          %1343 = sbr.rel (%p1341) target = $region72
        $region71: #{tpu_custom_call.1} parent=59 // pred_region
          %s1344 = smul.u32 2, %s28
          %s1346 = ssub.s32 512, 512
          %1347 = vsyncadd %s1337, %s1346
          %s1348 = smul.addr %s1344, 2
          %s1349 = smul.addr %s1348, 128
          %s1350 = scalar_lea.hbm %s10, %s1349
          %s1351 = sshll.u32 %s1340, 4
          %s1352 = int_to_ptr.vmem [resolvable:$true] %s1351
          %1357 = dma.vmem_to_hbm [thread:$0]  %s1352, 512, %s1350, %s1337, 128, 128, 8
        $region72: #{tpu_custom_call.1} parent=59 // pred_fallthru
          _
      $region60: #{tpu_custom_call.1} parent=5 // pred_fallthru
        _
      %p1358 = scmp.le.s32.totalorder 2, %s19
      // Predicated region
      $region73: #{tpu_custom_call.1} parent=5 // pred_check
        %p1359 = pneg %p1358
      $region74: #{tpu_custom_call.1} parent=5 // pred_check_branch
        %1361 = sbr.rel (%p1359) target = $region76
      $region75: #{tpu_custom_call.1} parent=5 // pred_region
        %s1362 = ssub.s32 %s19, 2
        // Predicated region
        $region77: #{tpu_custom_call.1} parent=75 // pred_check
          %p1363 = pneg %p310
        $region78: #{tpu_custom_call.1} parent=75 // pred_check_branch
          %1365 = sbr.rel (%p1363) target = $region80
        $region79: #{tpu_custom_call.1} parent=75 // pred_region
          %s1366 = sand.u32 %s295, 1
          %s1367 = scalar_lea.sflag [#allocation4], %s1366
          %s1368 = sand.u32 %s295, 1
          %s1369 = smul.addr %s1368, 32
          %s1370 = scalar_lea.vmem [#allocation3], %s1369
          %1371 = dma.done %s1367, 512
        $region80: #{tpu_custom_call.1} parent=75 // pred_fallthru
          _
      $region76: #{tpu_custom_call.1} parent=5 // pred_fallthru
        _
    $region6: #{tpu_custom_call.1} parent=1 // loop_footer
      %s23 = sadd.s32 1, %s19
    $region7: #{tpu_custom_call.1} parent=1 // loop_footer_branch
      %18 = sbr.rel target = $region3
    $region8: #{tpu_custom_call.1} parent=1 // loop_exit
      _
    %1372 = vsyncpa [#allocation4], 1
    %s1373 = scalar_lea.sflag [#allocation4], 1
    %1374 = vsyncpa %s1373, 1

</llo_original>
